<compile_context>
chip_gen: v7x
topology: tpu7x:2x2x1
jax: 0.10.0
libtpu: 0.0.40
codegen_flags: <defaults>
</compile_context>

<pallas_src>
import functools

import jax
import jax.numpy as jnp
from jax import lax
from jax.experimental import pallas as pl
from jax.experimental.pallas import tpu as pltpu

SOS = 1
EOS = 2


def _greedy_decode_kernel(zcs_ref, w_rz_ref, wih_n_ref, whh_n_ref,
                          b_rz_ref, b_in_ref, b_hn_ref,
                          wout_ref, bout_ref, resps_ref, *, max_utt_len):
    """Whole greedy decode loop in a single kernel invocation (no grid)."""
    B, H = zcs_ref.shape
    V = wout_ref.shape[1]
    L = resps_ref.shape[1]            # lane-padded response length (>= 128)

    # ---- loop-invariant values hoisted out of the unrolled loop ----
    b_rz = jnp.broadcast_to(b_rz_ref[...], (B, 2 * H))     # (B, 2H) f32
    b_in = jnp.broadcast_to(b_in_ref[...], (B, H))         # (B, H)  f32
    b_hn = jnp.broadcast_to(b_hn_ref[...], (B, H))         # (B, H)  f32
    b_out = jnp.broadcast_to(bout_ref[...], (B, V))        # (B, V)  f32

    iota_v = lax.broadcasted_iota(jnp.int32, (B, V), 1)    # lane index grid
    iota_l = lax.broadcasted_iota(jnp.int32, (B, L), 1)

    # packed-key argmax constants (first-max tie break; V <= 2**idx_bits)
    idx_bits = max((V - 1).bit_length(), 1)
    lo_mask = jnp.int32((1 << idx_bits) - 1)
    key_mask = jnp.int32(-(1 << idx_bits))
    idx_max = jnp.int32(V - 1)
    sign_fix = jnp.int32(0x7FFFFFFF)

    h = zcs_ref[...]                                        # (B, H) f32
    h_bf = h.astype(jnp.bfloat16)
    onehot = (iota_v == SOS).astype(jnp.bfloat16)           # (B, V) one-hot SOS

    resps_acc = jnp.zeros((B, L), jnp.int32)

    for i in range(max_utt_len):                            # statically unrolled
        # ---- r/z gates: ONE 256-deep MXU pass  [onehot | h] @ [Wih_rz ; Whh_rz]
        xh = jnp.concatenate([onehot, h_bf], axis=1)        # (B, V+H) bf16
        rz = jax.nn.sigmoid(
            jnp.dot(xh, w_rz_ref[...], preferred_element_type=jnp.float32)
            + b_rz)                                         # (B, 2H) f32
        r = rz[:, :H]
        z = rz[:, H:]

        # ---- n gate: gi_n / gh_n must stay separate for r * (gh_n + b_hn)
        gi_n = jnp.dot(onehot, wih_n_ref[...],
                       preferred_element_type=jnp.float32)  # (B, H)
        gh_n = jnp.dot(h_bf, whh_n_ref[...],
                       preferred_element_type=jnp.float32)  # (B, H)
        n = jnp.tanh(gi_n + b_in + r * (gh_n + b_hn))

        h = n + z * (h - n)                                 # (B, H) f32
        h_bf = h.astype(jnp.bfloat16)

        # ---- output projection + greedy argmax (single packed-key max reduce)
        logits = jnp.dot(h_bf, wout_ref[...],
                         preferred_element_type=jnp.float32) + b_out   # (B, V)
        bits = pltpu.bitcast(logits, jnp.int32)
        key = jnp.where(bits >= 0, bits, bits ^ sign_fix)   # monotone in logit
        packed = (key & key_mask) | (idx_max - iota_v)      # low bits = tie-break
        best = jnp.max(packed, axis=1, keepdims=True)       # ONE XLU reduce
        tok = idx_max - (best & lo_mask)                    # (B, 1) int32

        # ---- lane-dense accumulation of tokens (no per-step masked stores)
        resps_acc = jnp.where(iota_l == i, tok, resps_acc)

        # ---- next-step input: one-hot of chosen token (fused with W_ih above)
        onehot = (iota_v == tok).astype(jnp.bfloat16)

    resps_ref[...] = resps_acc                              # one unmasked store


@functools.partial(jax.jit, static_argnames=("max_utt_len",))
def sampling_decode(params, zs, cs, max_utt_len):
    zcs = jnp.concatenate([zs, cs], axis=1).astype(jnp.float32)   # (B, H)
    B, H = zcs.shape
    V, _ = params["embedding"].shape

    # Fuse the embedding table into the input projection: (V,E)@(E,3H)->(V,3H)
    embW_ih = jnp.dot(params["embedding"], params["w_ih"],
                      preferred_element_type=jnp.float32)
    w_hh = params["w_hh"]

    # Stacked r/z weights for one 256-deep contraction; n-gate weights split.
    w_rz = jnp.concatenate([embW_ih[:, :2 * H], w_hh[:, :2 * H]],
                           axis=0).astype(jnp.bfloat16)           # (V+H, 2H)
    wih_n = embW_ih[:, 2 * H:].astype(jnp.bfloat16)               # (V, H)
    whh_n = w_hh[:, 2 * H:].astype(jnp.bfloat16)                  # (H, H)
    w_out = params["w_out"].astype(jnp.bfloat16)                  # (H, V)

    b_ih, b_hh = params["b_ih"], params["b_hh"]
    b_rz = (b_ih + b_hh)[:, :2 * H]          # pre-summed r/z biases   (1, 2H)
    b_in = b_ih[:, 2 * H:]                   # n-gate input bias       (1, H)
    b_hn = b_hh[:, 2 * H:]                   # n-gate hidden bias      (1, H)
    b_out = params["b_out"]                  # (1, V)

    # lane-padded output so the final store is unmasked / lane-dense
    l_pad = max(128, ((max_utt_len + 127) // 128) * 128)

    kernel = functools.partial(_greedy_decode_kernel, max_utt_len=max_utt_len)
    vmem = pl.BlockSpec(memory_space=pltpu.MemorySpace.VMEM)
    resps_pad = pl.pallas_call(
        kernel,
        out_shape=jax.ShapeDtypeStruct((B, l_pad), jnp.int32),
        in_specs=[vmem] * 9,       # whole (tiny, ~0.3 MiB) operands in VMEM
        out_specs=vmem,
    )(zcs, w_rz, wih_n, whh_n, b_rz, b_in, b_hn, w_out, b_out)

    resps = resps_pad[:, :max_utt_len]

    # resp_lens: first EOS position in cat([resp, [EOS]]) + 1  (plain JAX glue)
    is_eos = resps == EOS
    resp_lens = jnp.where(jnp.any(is_eos, axis=1),
                          jnp.argmax(is_eos, axis=1) + 1,
                          max_utt_len + 1).astype(jnp.int32)
    return resps, resp_lens


def init_params(key, vocab, embed, hidden):
    def uni(k, shape, scale):
        return jax.random.uniform(k, shape, jnp.float32, -scale, scale)

    ks = jax.random.split(key, 7)
    s = 1.0 / float(jnp.sqrt(hidden))
    return {
        "embedding": uni(ks[0], (vocab, embed), 0.1),
        # GRU (gate order [r | z | n], weights stored transposed: (in, 3H))
        "w_ih": uni(ks[1], (embed, 3 * hidden), s),
        "w_hh": uni(ks[2], (hidden, 3 * hidden), s),
        "b_ih": uni(ks[3], (1, 3 * hidden), s),
        "b_hh": uni(ks[4], (1, 3 * hidden), s),
        # output projection rnn_decoder.out : Linear(H, V)
        "w_out": uni(ks[5], (hidden, vocab), s),
        "b_out": uni(ks[6], (1, vocab), s),
    }


if __name__ == "__main__":
    B = 8                     # batch (sublane-friendly)
    DZ, DC = 64, 64           # latent / context dims -> GRU hidden H = 128
    EMBED, VOCAB = 128, 128   # lane-aligned embedding dim / vocab size
    MAX_UTT_LEN = 8

    root = jax.random.PRNGKey(0)
    k_par, k_z, k_c = jax.random.split(root, 3)

    params = init_params(k_par, VOCAB, EMBED, DZ + DC)
    zs = jax.random.normal(k_z, (B, DZ), dtype=jnp.float32)
    cs = jax.random.normal(k_c, (B, DC), dtype=jnp.float32)

    resps, resp_lens = sampling_decode(params, zs, cs, max_utt_len=MAX_UTT_LEN)
    resps, resp_lens = jax.block_until_ready((resps, resp_lens))

    assert resps.shape == (B, MAX_UTT_LEN) and resps.dtype == jnp.int32
    assert resp_lens.shape == (B,) and resp_lens.dtype == jnp.int32
    assert bool(jnp.all((resps >= 0) & (resps < VOCAB)))
    assert bool(jnp.all((resp_lens >= 1) & (resp_lens <= MAX_UTT_LEN + 1)))
    print("KERNEL_OK")
</pallas_src>

<mosaic_0001>
module attributes {stable_mosaic.version = 11 : i64} {
  func.func @_greedy_decode_kernel(%arg0: memref<8x128xf32, #tpu.memory_space<vmem>>, %arg1: memref<256x256xbf16, #tpu.memory_space<vmem>>, %arg2: memref<128x128xbf16, #tpu.memory_space<vmem>>, %arg3: memref<128x128xbf16, #tpu.memory_space<vmem>>, %arg4: memref<1x256xf32, #tpu.memory_space<vmem>>, %arg5: memref<1x128xf32, #tpu.memory_space<vmem>>, %arg6: memref<1x128xf32, #tpu.memory_space<vmem>>, %arg7: memref<128x128xbf16, #tpu.memory_space<vmem>>, %arg8: memref<1x128xf32, #tpu.memory_space<vmem>>, %arg9: memref<8x128xi32, #tpu.memory_space<vmem>>) attributes {dimension_semantics = [], scalar_prefetch = 0 : i64, scratch_operands = 0 : i64, tpu.core_type = #tpu.core_type<tc>} {
    %c0 = arith.constant 0 : index
    %c0_0 = arith.constant 0 : index
    %0 = vector.load %arg4[%c0, %c0_0] : memref<1x256xf32, #tpu.memory_space<vmem>>, vector<1x256xf32>
    %1 = vector.shape_cast %0 : vector<1x256xf32> to vector<1x256xf32>
    %2 = vector.broadcast %1 : vector<1x256xf32> to vector<8x256xf32>
    %c0_1 = arith.constant 0 : index
    %c0_2 = arith.constant 0 : index
    %3 = vector.load %arg5[%c0_1, %c0_2] : memref<1x128xf32, #tpu.memory_space<vmem>>, vector<1x128xf32>
    %4 = vector.shape_cast %3 : vector<1x128xf32> to vector<1x128xf32>
    %5 = vector.broadcast %4 : vector<1x128xf32> to vector<8x128xf32>
    %c0_3 = arith.constant 0 : index
    %c0_4 = arith.constant 0 : index
    %6 = vector.load %arg6[%c0_3, %c0_4] : memref<1x128xf32, #tpu.memory_space<vmem>>, vector<1x128xf32>
    %7 = vector.shape_cast %6 : vector<1x128xf32> to vector<1x128xf32>
    %8 = vector.broadcast %7 : vector<1x128xf32> to vector<8x128xf32>
    %c0_5 = arith.constant 0 : index
    %c0_6 = arith.constant 0 : index
    %9 = vector.load %arg8[%c0_5, %c0_6] : memref<1x128xf32, #tpu.memory_space<vmem>>, vector<1x128xf32>
    %10 = vector.shape_cast %9 : vector<1x128xf32> to vector<1x128xf32>
    %11 = vector.broadcast %10 : vector<1x128xf32> to vector<8x128xf32>
    %12 = tpu.iota {dimensions = array<i32: 1>} : vector<8x128xi32>
    %13 = tpu.iota {dimensions = array<i32: 1>} : vector<8x128xi32>
    %c0_7 = arith.constant 0 : index
    %c0_8 = arith.constant 0 : index
    %14 = vector.load %arg0[%c0_7, %c0_8] : memref<8x128xf32, #tpu.memory_space<vmem>>, vector<8x128xf32>
    %15 = arith.truncf %14 : vector<8x128xf32> to vector<8x128xbf16>
    %c1_i32 = arith.constant 1 : i32
    %16 = vector.broadcast %c1_i32 : i32 to vector<8x128xi32>
    %17 = arith.cmpi eq, %12, %16 : vector<8x128xi32>
    %18 = arith.extui %17 : vector<8x128xi1> to vector<8x128xi32>
    %19 = arith.sitofp %18 : vector<8x128xi32> to vector<8x128xf32>
    %20 = arith.truncf %19 : vector<8x128xf32> to vector<8x128xbf16>
    %c0_i32 = arith.constant 0 : i32
    %21 = vector.broadcast %c0_i32 : i32 to vector<8x128xi32>
    %22 = tpu.concatenate %20, %15 in 1 : vector<8x128xbf16>, vector<8x128xbf16> -> vector<8x256xbf16>
    %c0_9 = arith.constant 0 : index
    %c0_10 = arith.constant 0 : index
    %23 = vector.load %arg1[%c0_9, %c0_10] : memref<256x256xbf16, #tpu.memory_space<vmem>>, vector<256x256xbf16>
    %cst = arith.constant dense<0.000000e+00> : vector<8x256xf32>
    %24 = tpu.matmul %22, %23, %cst {dimension_numbers = #tpu.dot_dimension_numbers<[1], [0], [0], [1], [0, 0, 1, 1], [], []>} : vector<8x256xbf16>, vector<256x256xbf16>, vector<8x256xf32> -> vector<8x256xf32>
    %25 = arith.addf %24, %2 : vector<8x256xf32>
    %26 = arith.negf %25 : vector<8x256xf32>
    %27 = math.exp %26 : vector<8x256xf32>
    %cst_11 = arith.constant 1.000000e+00 : f32
    %28 = vector.broadcast %cst_11 : f32 to vector<8x256xf32>
    %29 = arith.addf %28, %27 : vector<8x256xf32>
    %30 = arith.divf %28, %29 : vector<8x256xf32>
    %31 = vector.extract_strided_slice %30 {offsets = [0, 0], sizes = [8, 128], strides = [1, 1]} : vector<8x256xf32> to vector<8x128xf32>
    %32 = vector.extract_strided_slice %30 {offsets = [0, 128], sizes = [8, 128], strides = [1, 1]} : vector<8x256xf32> to vector<8x128xf32>
    %c0_12 = arith.constant 0 : index
    %c0_13 = arith.constant 0 : index
    %33 = vector.load %arg2[%c0_12, %c0_13] : memref<128x128xbf16, #tpu.memory_space<vmem>>, vector<128x128xbf16>
    %cst_14 = arith.constant dense<0.000000e+00> : vector<8x128xf32>
    %34 = tpu.matmul %20, %33, %cst_14 {dimension_numbers = #tpu.dot_dimension_numbers<[1], [0], [0], [1], [0, 0, 1, 1], [], []>} : vector<8x128xbf16>, vector<128x128xbf16>, vector<8x128xf32> -> vector<8x128xf32>
    %c0_15 = arith.constant 0 : index
    %c0_16 = arith.constant 0 : index
    %35 = vector.load %arg3[%c0_15, %c0_16] : memref<128x128xbf16, #tpu.memory_space<vmem>>, vector<128x128xbf16>
    %cst_17 = arith.constant dense<0.000000e+00> : vector<8x128xf32>
    %36 = tpu.matmul %15, %35, %cst_17 {dimension_numbers = #tpu.dot_dimension_numbers<[1], [0], [0], [1], [0, 0, 1, 1], [], []>} : vector<8x128xbf16>, vector<128x128xbf16>, vector<8x128xf32> -> vector<8x128xf32>
    %37 = arith.addf %34, %5 : vector<8x128xf32>
    %38 = arith.addf %36, %8 : vector<8x128xf32>
    %39 = arith.mulf %31, %38 : vector<8x128xf32>
    %40 = arith.addf %37, %39 : vector<8x128xf32>
    %41 = math.tanh %40 : vector<8x128xf32>
    %42 = arith.subf %14, %41 : vector<8x128xf32>
    %43 = arith.mulf %32, %42 : vector<8x128xf32>
    %44 = arith.addf %41, %43 : vector<8x128xf32>
    %45 = arith.truncf %44 : vector<8x128xf32> to vector<8x128xbf16>
    %c0_18 = arith.constant 0 : index
    %c0_19 = arith.constant 0 : index
    %46 = vector.load %arg7[%c0_18, %c0_19] : memref<128x128xbf16, #tpu.memory_space<vmem>>, vector<128x128xbf16>
    %cst_20 = arith.constant dense<0.000000e+00> : vector<8x128xf32>
    %47 = tpu.matmul %45, %46, %cst_20 {dimension_numbers = #tpu.dot_dimension_numbers<[1], [0], [0], [1], [0, 0, 1, 1], [], []>} : vector<8x128xbf16>, vector<128x128xbf16>, vector<8x128xf32> -> vector<8x128xf32>
    %48 = arith.addf %47, %11 : vector<8x128xf32>
    %49 = tpu.bitcast %48 : vector<8x128xf32> -> vector<8x128xi32>
    %c0_i32_21 = arith.constant 0 : i32
    %50 = vector.broadcast %c0_i32_21 : i32 to vector<8x128xi32>
    %51 = arith.cmpi sge, %49, %50 : vector<8x128xi32>
    %c2147483647_i32 = arith.constant 2147483647 : i32
    %52 = vector.broadcast %c2147483647_i32 : i32 to vector<8x128xi32>
    %53 = arith.xori %49, %52 : vector<8x128xi32>
    %54 = arith.select %51, %49, %53 : vector<8x128xi1>, vector<8x128xi32>
    %c-128_i32 = arith.constant -128 : i32
    %55 = vector.broadcast %c-128_i32 : i32 to vector<8x128xi32>
    %56 = arith.andi %54, %55 : vector<8x128xi32>
    %c127_i32 = arith.constant 127 : i32
    %57 = vector.broadcast %c127_i32 : i32 to vector<8x128xi32>
    %58 = arith.subi %57, %12 : vector<8x128xi32>
    %59 = arith.ori %56, %58 : vector<8x128xi32>
    %cst_22 = arith.constant dense<-2147483648> : vector<8xi32>
    %60 = vector.multi_reduction <maxsi>, %59, %cst_22 [1] : vector<8x128xi32> to vector<8xi32>
    %61 = vector.shape_cast %60 : vector<8xi32> to vector<8x1xi32>
    %c127_i32_23 = arith.constant 127 : i32
    %62 = vector.broadcast %c127_i32_23 : i32 to vector<8x1xi32>
    %63 = arith.andi %61, %62 : vector<8x1xi32>
    %c127_i32_24 = arith.constant 127 : i32
    %64 = vector.broadcast %c127_i32_24 : i32 to vector<8x1xi32>
    %65 = arith.subi %64, %63 : vector<8x1xi32>
    %c0_i32_25 = arith.constant 0 : i32
    %66 = vector.broadcast %c0_i32_25 : i32 to vector<8x128xi32>
    %67 = arith.cmpi eq, %13, %66 : vector<8x128xi32>
    %68 = vector.shape_cast %65 : vector<8x1xi32> to vector<8x1xi32>
    %69 = vector.broadcast %68 : vector<8x1xi32> to vector<8x128xi32>
    %70 = arith.select %67, %69, %21 : vector<8x128xi1>, vector<8x128xi32>
    %71 = vector.broadcast %65 : vector<8x1xi32> to vector<8x128xi32>
    %72 = arith.cmpi eq, %12, %71 : vector<8x128xi32>
    %73 = arith.extui %72 : vector<8x128xi1> to vector<8x128xi32>
    %74 = arith.sitofp %73 : vector<8x128xi32> to vector<8x128xf32>
    %75 = arith.truncf %74 : vector<8x128xf32> to vector<8x128xbf16>
    %76 = tpu.concatenate %75, %45 in 1 : vector<8x128xbf16>, vector<8x128xbf16> -> vector<8x256xbf16>
    %c0_26 = arith.constant 0 : index
    %c0_27 = arith.constant 0 : index
    %77 = vector.load %arg1[%c0_26, %c0_27] : memref<256x256xbf16, #tpu.memory_space<vmem>>, vector<256x256xbf16>
    %cst_28 = arith.constant dense<0.000000e+00> : vector<8x256xf32>
    %78 = tpu.matmul %76, %77, %cst_28 {dimension_numbers = #tpu.dot_dimension_numbers<[1], [0], [0], [1], [0, 0, 1, 1], [], []>} : vector<8x256xbf16>, vector<256x256xbf16>, vector<8x256xf32> -> vector<8x256xf32>
    %79 = arith.addf %78, %2 : vector<8x256xf32>
    %80 = arith.negf %79 : vector<8x256xf32>
    %81 = math.exp %80 : vector<8x256xf32>
    %cst_29 = arith.constant 1.000000e+00 : f32
    %82 = vector.broadcast %cst_29 : f32 to vector<8x256xf32>
    %83 = arith.addf %82, %81 : vector<8x256xf32>
    %84 = arith.divf %82, %83 : vector<8x256xf32>
    %85 = vector.extract_strided_slice %84 {offsets = [0, 0], sizes = [8, 128], strides = [1, 1]} : vector<8x256xf32> to vector<8x128xf32>
    %86 = vector.extract_strided_slice %84 {offsets = [0, 128], sizes = [8, 128], strides = [1, 1]} : vector<8x256xf32> to vector<8x128xf32>
    %c0_30 = arith.constant 0 : index
    %c0_31 = arith.constant 0 : index
    %87 = vector.load %arg2[%c0_30, %c0_31] : memref<128x128xbf16, #tpu.memory_space<vmem>>, vector<128x128xbf16>
    %cst_32 = arith.constant dense<0.000000e+00> : vector<8x128xf32>
    %88 = tpu.matmul %75, %87, %cst_32 {dimension_numbers = #tpu.dot_dimension_numbers<[1], [0], [0], [1], [0, 0, 1, 1], [], []>} : vector<8x128xbf16>, vector<128x128xbf16>, vector<8x128xf32> -> vector<8x128xf32>
    %c0_33 = arith.constant 0 : index
    %c0_34 = arith.constant 0 : index
    %89 = vector.load %arg3[%c0_33, %c0_34] : memref<128x128xbf16, #tpu.memory_space<vmem>>, vector<128x128xbf16>
    %cst_35 = arith.constant dense<0.000000e+00> : vector<8x128xf32>
    %90 = tpu.matmul %45, %89, %cst_35 {dimension_numbers = #tpu.dot_dimension_numbers<[1], [0], [0], [1], [0, 0, 1, 1], [], []>} : vector<8x128xbf16>, vector<128x128xbf16>, vector<8x128xf32> -> vector<8x128xf32>
    %91 = arith.addf %88, %5 : vector<8x128xf32>
    %92 = arith.addf %90, %8 : vector<8x128xf32>
    %93 = arith.mulf %85, %92 : vector<8x128xf32>
    %94 = arith.addf %91, %93 : vector<8x128xf32>
    %95 = math.tanh %94 : vector<8x128xf32>
    %96 = arith.subf %44, %95 : vector<8x128xf32>
    %97 = arith.mulf %86, %96 : vector<8x128xf32>
    %98 = arith.addf %95, %97 : vector<8x128xf32>
    %99 = arith.truncf %98 : vector<8x128xf32> to vector<8x128xbf16>
    %c0_36 = arith.constant 0 : index
    %c0_37 = arith.constant 0 : index
    %100 = vector.load %arg7[%c0_36, %c0_37] : memref<128x128xbf16, #tpu.memory_space<vmem>>, vector<128x128xbf16>
    %cst_38 = arith.constant dense<0.000000e+00> : vector<8x128xf32>
    %101 = tpu.matmul %99, %100, %cst_38 {dimension_numbers = #tpu.dot_dimension_numbers<[1], [0], [0], [1], [0, 0, 1, 1], [], []>} : vector<8x128xbf16>, vector<128x128xbf16>, vector<8x128xf32> -> vector<8x128xf32>
    %102 = arith.addf %101, %11 : vector<8x128xf32>
    %103 = tpu.bitcast %102 : vector<8x128xf32> -> vector<8x128xi32>
    %c0_i32_39 = arith.constant 0 : i32
    %104 = vector.broadcast %c0_i32_39 : i32 to vector<8x128xi32>
    %105 = arith.cmpi sge, %103, %104 : vector<8x128xi32>
    %c2147483647_i32_40 = arith.constant 2147483647 : i32
    %106 = vector.broadcast %c2147483647_i32_40 : i32 to vector<8x128xi32>
    %107 = arith.xori %103, %106 : vector<8x128xi32>
    %108 = arith.select %105, %103, %107 : vector<8x128xi1>, vector<8x128xi32>
    %c-128_i32_41 = arith.constant -128 : i32
    %109 = vector.broadcast %c-128_i32_41 : i32 to vector<8x128xi32>
    %110 = arith.andi %108, %109 : vector<8x128xi32>
    %c127_i32_42 = arith.constant 127 : i32
    %111 = vector.broadcast %c127_i32_42 : i32 to vector<8x128xi32>
    %112 = arith.subi %111, %12 : vector<8x128xi32>
    %113 = arith.ori %110, %112 : vector<8x128xi32>
    %cst_43 = arith.constant dense<-2147483648> : vector<8xi32>
    %114 = vector.multi_reduction <maxsi>, %113, %cst_43 [1] : vector<8x128xi32> to vector<8xi32>
    %115 = vector.shape_cast %114 : vector<8xi32> to vector<8x1xi32>
    %c127_i32_44 = arith.constant 127 : i32
    %116 = vector.broadcast %c127_i32_44 : i32 to vector<8x1xi32>
    %117 = arith.andi %115, %116 : vector<8x1xi32>
    %c127_i32_45 = arith.constant 127 : i32
    %118 = vector.broadcast %c127_i32_45 : i32 to vector<8x1xi32>
    %119 = arith.subi %118, %117 : vector<8x1xi32>
    %c1_i32_46 = arith.constant 1 : i32
    %120 = vector.broadcast %c1_i32_46 : i32 to vector<8x128xi32>
    %121 = arith.cmpi eq, %13, %120 : vector<8x128xi32>
    %122 = vector.shape_cast %119 : vector<8x1xi32> to vector<8x1xi32>
    %123 = vector.broadcast %122 : vector<8x1xi32> to vector<8x128xi32>
    %124 = arith.select %121, %123, %70 : vector<8x128xi1>, vector<8x128xi32>
    %125 = vector.broadcast %119 : vector<8x1xi32> to vector<8x128xi32>
    %126 = arith.cmpi eq, %12, %125 : vector<8x128xi32>
    %127 = arith.extui %126 : vector<8x128xi1> to vector<8x128xi32>
    %128 = arith.sitofp %127 : vector<8x128xi32> to vector<8x128xf32>
    %129 = arith.truncf %128 : vector<8x128xf32> to vector<8x128xbf16>
    %130 = tpu.concatenate %129, %99 in 1 : vector<8x128xbf16>, vector<8x128xbf16> -> vector<8x256xbf16>
    %c0_47 = arith.constant 0 : index
    %c0_48 = arith.constant 0 : index
    %131 = vector.load %arg1[%c0_47, %c0_48] : memref<256x256xbf16, #tpu.memory_space<vmem>>, vector<256x256xbf16>
    %cst_49 = arith.constant dense<0.000000e+00> : vector<8x256xf32>
    %132 = tpu.matmul %130, %131, %cst_49 {dimension_numbers = #tpu.dot_dimension_numbers<[1], [0], [0], [1], [0, 0, 1, 1], [], []>} : vector<8x256xbf16>, vector<256x256xbf16>, vector<8x256xf32> -> vector<8x256xf32>
    %133 = arith.addf %132, %2 : vector<8x256xf32>
    %134 = arith.negf %133 : vector<8x256xf32>
    %135 = math.exp %134 : vector<8x256xf32>
    %cst_50 = arith.constant 1.000000e+00 : f32
    %136 = vector.broadcast %cst_50 : f32 to vector<8x256xf32>
    %137 = arith.addf %136, %135 : vector<8x256xf32>
    %138 = arith.divf %136, %137 : vector<8x256xf32>
    %139 = vector.extract_strided_slice %138 {offsets = [0, 0], sizes = [8, 128], strides = [1, 1]} : vector<8x256xf32> to vector<8x128xf32>
    %140 = vector.extract_strided_slice %138 {offsets = [0, 128], sizes = [8, 128], strides = [1, 1]} : vector<8x256xf32> to vector<8x128xf32>
    %c0_51 = arith.constant 0 : index
    %c0_52 = arith.constant 0 : index
    %141 = vector.load %arg2[%c0_51, %c0_52] : memref<128x128xbf16, #tpu.memory_space<vmem>>, vector<128x128xbf16>
    %cst_53 = arith.constant dense<0.000000e+00> : vector<8x128xf32>
    %142 = tpu.matmul %129, %141, %cst_53 {dimension_numbers = #tpu.dot_dimension_numbers<[1], [0], [0], [1], [0, 0, 1, 1], [], []>} : vector<8x128xbf16>, vector<128x128xbf16>, vector<8x128xf32> -> vector<8x128xf32>
    %c0_54 = arith.constant 0 : index
    %c0_55 = arith.constant 0 : index
    %143 = vector.load %arg3[%c0_54, %c0_55] : memref<128x128xbf16, #tpu.memory_space<vmem>>, vector<128x128xbf16>
    %cst_56 = arith.constant dense<0.000000e+00> : vector<8x128xf32>
    %144 = tpu.matmul %99, %143, %cst_56 {dimension_numbers = #tpu.dot_dimension_numbers<[1], [0], [0], [1], [0, 0, 1, 1], [], []>} : vector<8x128xbf16>, vector<128x128xbf16>, vector<8x128xf32> -> vector<8x128xf32>
    %145 = arith.addf %142, %5 : vector<8x128xf32>
    %146 = arith.addf %144, %8 : vector<8x128xf32>
    %147 = arith.mulf %139, %146 : vector<8x128xf32>
    %148 = arith.addf %145, %147 : vector<8x128xf32>
    %149 = math.tanh %148 : vector<8x128xf32>
    %150 = arith.subf %98, %149 : vector<8x128xf32>
    %151 = arith.mulf %140, %150 : vector<8x128xf32>
    %152 = arith.addf %149, %151 : vector<8x128xf32>
    %153 = arith.truncf %152 : vector<8x128xf32> to vector<8x128xbf16>
    %c0_57 = arith.constant 0 : index
    %c0_58 = arith.constant 0 : index
    %154 = vector.load %arg7[%c0_57, %c0_58] : memref<128x128xbf16, #tpu.memory_space<vmem>>, vector<128x128xbf16>
    %cst_59 = arith.constant dense<0.000000e+00> : vector<8x128xf32>
    %155 = tpu.matmul %153, %154, %cst_59 {dimension_numbers = #tpu.dot_dimension_numbers<[1], [0], [0], [1], [0, 0, 1, 1], [], []>} : vector<8x128xbf16>, vector<128x128xbf16>, vector<8x128xf32> -> vector<8x128xf32>
    %156 = arith.addf %155, %11 : vector<8x128xf32>
    %157 = tpu.bitcast %156 : vector<8x128xf32> -> vector<8x128xi32>
    %c0_i32_60 = arith.constant 0 : i32
    %158 = vector.broadcast %c0_i32_60 : i32 to vector<8x128xi32>
    %159 = arith.cmpi sge, %157, %158 : vector<8x128xi32>
    %c2147483647_i32_61 = arith.constant 2147483647 : i32
    %160 = vector.broadcast %c2147483647_i32_61 : i32 to vector<8x128xi32>
    %161 = arith.xori %157, %160 : vector<8x128xi32>
    %162 = arith.select %159, %157, %161 : vector<8x128xi1>, vector<8x128xi32>
    %c-128_i32_62 = arith.constant -128 : i32
    %163 = vector.broadcast %c-128_i32_62 : i32 to vector<8x128xi32>
    %164 = arith.andi %162, %163 : vector<8x128xi32>
    %c127_i32_63 = arith.constant 127 : i32
    %165 = vector.broadcast %c127_i32_63 : i32 to vector<8x128xi32>
    %166 = arith.subi %165, %12 : vector<8x128xi32>
    %167 = arith.ori %164, %166 : vector<8x128xi32>
    %cst_64 = arith.constant dense<-2147483648> : vector<8xi32>
    %168 = vector.multi_reduction <maxsi>, %167, %cst_64 [1] : vector<8x128xi32> to vector<8xi32>
    %169 = vector.shape_cast %168 : vector<8xi32> to vector<8x1xi32>
    %c127_i32_65 = arith.constant 127 : i32
    %170 = vector.broadcast %c127_i32_65 : i32 to vector<8x1xi32>
    %171 = arith.andi %169, %170 : vector<8x1xi32>
    %c127_i32_66 = arith.constant 127 : i32
    %172 = vector.broadcast %c127_i32_66 : i32 to vector<8x1xi32>
    %173 = arith.subi %172, %171 : vector<8x1xi32>
    %c2_i32 = arith.constant 2 : i32
    %174 = vector.broadcast %c2_i32 : i32 to vector<8x128xi32>
    %175 = arith.cmpi eq, %13, %174 : vector<8x128xi32>
    %176 = vector.shape_cast %173 : vector<8x1xi32> to vector<8x1xi32>
    %177 = vector.broadcast %176 : vector<8x1xi32> to vector<8x128xi32>
    %178 = arith.select %175, %177, %124 : vector<8x128xi1>, vector<8x128xi32>
    %179 = vector.broadcast %173 : vector<8x1xi32> to vector<8x128xi32>
    %180 = arith.cmpi eq, %12, %179 : vector<8x128xi32>
    %181 = arith.extui %180 : vector<8x128xi1> to vector<8x128xi32>
    %182 = arith.sitofp %181 : vector<8x128xi32> to vector<8x128xf32>
    %183 = arith.truncf %182 : vector<8x128xf32> to vector<8x128xbf16>
    %184 = tpu.concatenate %183, %153 in 1 : vector<8x128xbf16>, vector<8x128xbf16> -> vector<8x256xbf16>
    %c0_67 = arith.constant 0 : index
    %c0_68 = arith.constant 0 : index
    %185 = vector.load %arg1[%c0_67, %c0_68] : memref<256x256xbf16, #tpu.memory_space<vmem>>, vector<256x256xbf16>
    %cst_69 = arith.constant dense<0.000000e+00> : vector<8x256xf32>
    %186 = tpu.matmul %184, %185, %cst_69 {dimension_numbers = #tpu.dot_dimension_numbers<[1], [0], [0], [1], [0, 0, 1, 1], [], []>} : vector<8x256xbf16>, vector<256x256xbf16>, vector<8x256xf32> -> vector<8x256xf32>
    %187 = arith.addf %186, %2 : vector<8x256xf32>
    %188 = arith.negf %187 : vector<8x256xf32>
    %189 = math.exp %188 : vector<8x256xf32>
    %cst_70 = arith.constant 1.000000e+00 : f32
    %190 = vector.broadcast %cst_70 : f32 to vector<8x256xf32>
    %191 = arith.addf %190, %189 : vector<8x256xf32>
    %192 = arith.divf %190, %191 : vector<8x256xf32>
    %193 = vector.extract_strided_slice %192 {offsets = [0, 0], sizes = [8, 128], strides = [1, 1]} : vector<8x256xf32> to vector<8x128xf32>
    %194 = vector.extract_strided_slice %192 {offsets = [0, 128], sizes = [8, 128], strides = [1, 1]} : vector<8x256xf32> to vector<8x128xf32>
    %c0_71 = arith.constant 0 : index
    %c0_72 = arith.constant 0 : index
    %195 = vector.load %arg2[%c0_71, %c0_72] : memref<128x128xbf16, #tpu.memory_space<vmem>>, vector<128x128xbf16>
    %cst_73 = arith.constant dense<0.000000e+00> : vector<8x128xf32>
    %196 = tpu.matmul %183, %195, %cst_73 {dimension_numbers = #tpu.dot_dimension_numbers<[1], [0], [0], [1], [0, 0, 1, 1], [], []>} : vector<8x128xbf16>, vector<128x128xbf16>, vector<8x128xf32> -> vector<8x128xf32>
    %c0_74 = arith.constant 0 : index
    %c0_75 = arith.constant 0 : index
    %197 = vector.load %arg3[%c0_74, %c0_75] : memref<128x128xbf16, #tpu.memory_space<vmem>>, vector<128x128xbf16>
    %cst_76 = arith.constant dense<0.000000e+00> : vector<8x128xf32>
    %198 = tpu.matmul %153, %197, %cst_76 {dimension_numbers = #tpu.dot_dimension_numbers<[1], [0], [0], [1], [0, 0, 1, 1], [], []>} : vector<8x128xbf16>, vector<128x128xbf16>, vector<8x128xf32> -> vector<8x128xf32>
    %199 = arith.addf %196, %5 : vector<8x128xf32>
    %200 = arith.addf %198, %8 : vector<8x128xf32>
    %201 = arith.mulf %193, %200 : vector<8x128xf32>
    %202 = arith.addf %199, %201 : vector<8x128xf32>
    %203 = math.tanh %202 : vector<8x128xf32>
    %204 = arith.subf %152, %203 : vector<8x128xf32>
    %205 = arith.mulf %194, %204 : vector<8x128xf32>
    %206 = arith.addf %203, %205 : vector<8x128xf32>
    %207 = arith.truncf %206 : vector<8x128xf32> to vector<8x128xbf16>
    %c0_77 = arith.constant 0 : index
    %c0_78 = arith.constant 0 : index
    %208 = vector.load %arg7[%c0_77, %c0_78] : memref<128x128xbf16, #tpu.memory_space<vmem>>, vector<128x128xbf16>
    %cst_79 = arith.constant dense<0.000000e+00> : vector<8x128xf32>
    %209 = tpu.matmul %207, %208, %cst_79 {dimension_numbers = #tpu.dot_dimension_numbers<[1], [0], [0], [1], [0, 0, 1, 1], [], []>} : vector<8x128xbf16>, vector<128x128xbf16>, vector<8x128xf32> -> vector<8x128xf32>
    %210 = arith.addf %209, %11 : vector<8x128xf32>
    %211 = tpu.bitcast %210 : vector<8x128xf32> -> vector<8x128xi32>
    %c0_i32_80 = arith.constant 0 : i32
    %212 = vector.broadcast %c0_i32_80 : i32 to vector<8x128xi32>
    %213 = arith.cmpi sge, %211, %212 : vector<8x128xi32>
    %c2147483647_i32_81 = arith.constant 2147483647 : i32
    %214 = vector.broadcast %c2147483647_i32_81 : i32 to vector<8x128xi32>
    %215 = arith.xori %211, %214 : vector<8x128xi32>
    %216 = arith.select %213, %211, %215 : vector<8x128xi1>, vector<8x128xi32>
    %c-128_i32_82 = arith.constant -128 : i32
    %217 = vector.broadcast %c-128_i32_82 : i32 to vector<8x128xi32>
    %218 = arith.andi %216, %217 : vector<8x128xi32>
    %c127_i32_83 = arith.constant 127 : i32
    %219 = vector.broadcast %c127_i32_83 : i32 to vector<8x128xi32>
    %220 = arith.subi %219, %12 : vector<8x128xi32>
    %221 = arith.ori %218, %220 : vector<8x128xi32>
    %cst_84 = arith.constant dense<-2147483648> : vector<8xi32>
    %222 = vector.multi_reduction <maxsi>, %221, %cst_84 [1] : vector<8x128xi32> to vector<8xi32>
    %223 = vector.shape_cast %222 : vector<8xi32> to vector<8x1xi32>
    %c127_i32_85 = arith.constant 127 : i32
    %224 = vector.broadcast %c127_i32_85 : i32 to vector<8x1xi32>
    %225 = arith.andi %223, %224 : vector<8x1xi32>
    %c127_i32_86 = arith.constant 127 : i32
    %226 = vector.broadcast %c127_i32_86 : i32 to vector<8x1xi32>
    %227 = arith.subi %226, %225 : vector<8x1xi32>
    %c3_i32 = arith.constant 3 : i32
    %228 = vector.broadcast %c3_i32 : i32 to vector<8x128xi32>
    %229 = arith.cmpi eq, %13, %228 : vector<8x128xi32>
    %230 = vector.shape_cast %227 : vector<8x1xi32> to vector<8x1xi32>
    %231 = vector.broadcast %230 : vector<8x1xi32> to vector<8x128xi32>
    %232 = arith.select %229, %231, %178 : vector<8x128xi1>, vector<8x128xi32>
    %233 = vector.broadcast %227 : vector<8x1xi32> to vector<8x128xi32>
    %234 = arith.cmpi eq, %12, %233 : vector<8x128xi32>
    %235 = arith.extui %234 : vector<8x128xi1> to vector<8x128xi32>
    %236 = arith.sitofp %235 : vector<8x128xi32> to vector<8x128xf32>
    %237 = arith.truncf %236 : vector<8x128xf32> to vector<8x128xbf16>
    %238 = tpu.concatenate %237, %207 in 1 : vector<8x128xbf16>, vector<8x128xbf16> -> vector<8x256xbf16>
    %c0_87 = arith.constant 0 : index
    %c0_88 = arith.constant 0 : index
    %239 = vector.load %arg1[%c0_87, %c0_88] : memref<256x256xbf16, #tpu.memory_space<vmem>>, vector<256x256xbf16>
    %cst_89 = arith.constant dense<0.000000e+00> : vector<8x256xf32>
    %240 = tpu.matmul %238, %239, %cst_89 {dimension_numbers = #tpu.dot_dimension_numbers<[1], [0], [0], [1], [0, 0, 1, 1], [], []>} : vector<8x256xbf16>, vector<256x256xbf16>, vector<8x256xf32> -> vector<8x256xf32>
    %241 = arith.addf %240, %2 : vector<8x256xf32>
    %242 = arith.negf %241 : vector<8x256xf32>
    %243 = math.exp %242 : vector<8x256xf32>
    %cst_90 = arith.constant 1.000000e+00 : f32
    %244 = vector.broadcast %cst_90 : f32 to vector<8x256xf32>
    %245 = arith.addf %244, %243 : vector<8x256xf32>
    %246 = arith.divf %244, %245 : vector<8x256xf32>
    %247 = vector.extract_strided_slice %246 {offsets = [0, 0], sizes = [8, 128], strides = [1, 1]} : vector<8x256xf32> to vector<8x128xf32>
    %248 = vector.extract_strided_slice %246 {offsets = [0, 128], sizes = [8, 128], strides = [1, 1]} : vector<8x256xf32> to vector<8x128xf32>
    %c0_91 = arith.constant 0 : index
    %c0_92 = arith.constant 0 : index
    %249 = vector.load %arg2[%c0_91, %c0_92] : memref<128x128xbf16, #tpu.memory_space<vmem>>, vector<128x128xbf16>
    %cst_93 = arith.constant dense<0.000000e+00> : vector<8x128xf32>
    %250 = tpu.matmul %237, %249, %cst_93 {dimension_numbers = #tpu.dot_dimension_numbers<[1], [0], [0], [1], [0, 0, 1, 1], [], []>} : vector<8x128xbf16>, vector<128x128xbf16>, vector<8x128xf32> -> vector<8x128xf32>
    %c0_94 = arith.constant 0 : index
    %c0_95 = arith.constant 0 : index
    %251 = vector.load %arg3[%c0_94, %c0_95] : memref<128x128xbf16, #tpu.memory_space<vmem>>, vector<128x128xbf16>
    %cst_96 = arith.constant dense<0.000000e+00> : vector<8x128xf32>
    %252 = tpu.matmul %207, %251, %cst_96 {dimension_numbers = #tpu.dot_dimension_numbers<[1], [0], [0], [1], [0, 0, 1, 1], [], []>} : vector<8x128xbf16>, vector<128x128xbf16>, vector<8x128xf32> -> vector<8x128xf32>
    %253 = arith.addf %250, %5 : vector<8x128xf32>
    %254 = arith.addf %252, %8 : vector<8x128xf32>
    %255 = arith.mulf %247, %254 : vector<8x128xf32>
    %256 = arith.addf %253, %255 : vector<8x128xf32>
    %257 = math.tanh %256 : vector<8x128xf32>
    %258 = arith.subf %206, %257 : vector<8x128xf32>
    %259 = arith.mulf %248, %258 : vector<8x128xf32>
    %260 = arith.addf %257, %259 : vector<8x128xf32>
    %261 = arith.truncf %260 : vector<8x128xf32> to vector<8x128xbf16>
    %c0_97 = arith.constant 0 : index
    %c0_98 = arith.constant 0 : index
    %262 = vector.load %arg7[%c0_97, %c0_98] : memref<128x128xbf16, #tpu.memory_space<vmem>>, vector<128x128xbf16>
    %cst_99 = arith.constant dense<0.000000e+00> : vector<8x128xf32>
    %263 = tpu.matmul %261, %262, %cst_99 {dimension_numbers = #tpu.dot_dimension_numbers<[1], [0], [0], [1], [0, 0, 1, 1], [], []>} : vector<8x128xbf16>, vector<128x128xbf16>, vector<8x128xf32> -> vector<8x128xf32>
    %264 = arith.addf %263, %11 : vector<8x128xf32>
    %265 = tpu.bitcast %264 : vector<8x128xf32> -> vector<8x128xi32>
    %c0_i32_100 = arith.constant 0 : i32
    %266 = vector.broadcast %c0_i32_100 : i32 to vector<8x128xi32>
    %267 = arith.cmpi sge, %265, %266 : vector<8x128xi32>
    %c2147483647_i32_101 = arith.constant 2147483647 : i32
    %268 = vector.broadcast %c2147483647_i32_101 : i32 to vector<8x128xi32>
    %269 = arith.xori %265, %268 : vector<8x128xi32>
    %270 = arith.select %267, %265, %269 : vector<8x128xi1>, vector<8x128xi32>
    %c-128_i32_102 = arith.constant -128 : i32
    %271 = vector.broadcast %c-128_i32_102 : i32 to vector<8x128xi32>
    %272 = arith.andi %270, %271 : vector<8x128xi32>
    %c127_i32_103 = arith.constant 127 : i32
    %273 = vector.broadcast %c127_i32_103 : i32 to vector<8x128xi32>
    %274 = arith.subi %273, %12 : vector<8x128xi32>
    %275 = arith.ori %272, %274 : vector<8x128xi32>
    %cst_104 = arith.constant dense<-2147483648> : vector<8xi32>
    %276 = vector.multi_reduction <maxsi>, %275, %cst_104 [1] : vector<8x128xi32> to vector<8xi32>
    %277 = vector.shape_cast %276 : vector<8xi32> to vector<8x1xi32>
    %c127_i32_105 = arith.constant 127 : i32
    %278 = vector.broadcast %c127_i32_105 : i32 to vector<8x1xi32>
    %279 = arith.andi %277, %278 : vector<8x1xi32>
    %c127_i32_106 = arith.constant 127 : i32
    %280 = vector.broadcast %c127_i32_106 : i32 to vector<8x1xi32>
    %281 = arith.subi %280, %279 : vector<8x1xi32>
    %c4_i32 = arith.constant 4 : i32
    %282 = vector.broadcast %c4_i32 : i32 to vector<8x128xi32>
    %283 = arith.cmpi eq, %13, %282 : vector<8x128xi32>
    %284 = vector.shape_cast %281 : vector<8x1xi32> to vector<8x1xi32>
    %285 = vector.broadcast %284 : vector<8x1xi32> to vector<8x128xi32>
    %286 = arith.select %283, %285, %232 : vector<8x128xi1>, vector<8x128xi32>
    %287 = vector.broadcast %281 : vector<8x1xi32> to vector<8x128xi32>
    %288 = arith.cmpi eq, %12, %287 : vector<8x128xi32>
    %289 = arith.extui %288 : vector<8x128xi1> to vector<8x128xi32>
    %290 = arith.sitofp %289 : vector<8x128xi32> to vector<8x128xf32>
    %291 = arith.truncf %290 : vector<8x128xf32> to vector<8x128xbf16>
    %292 = tpu.concatenate %291, %261 in 1 : vector<8x128xbf16>, vector<8x128xbf16> -> vector<8x256xbf16>
    %c0_107 = arith.constant 0 : index
    %c0_108 = arith.constant 0 : index
    %293 = vector.load %arg1[%c0_107, %c0_108] : memref<256x256xbf16, #tpu.memory_space<vmem>>, vector<256x256xbf16>
    %cst_109 = arith.constant dense<0.000000e+00> : vector<8x256xf32>
    %294 = tpu.matmul %292, %293, %cst_109 {dimension_numbers = #tpu.dot_dimension_numbers<[1], [0], [0], [1], [0, 0, 1, 1], [], []>} : vector<8x256xbf16>, vector<256x256xbf16>, vector<8x256xf32> -> vector<8x256xf32>
    %295 = arith.addf %294, %2 : vector<8x256xf32>
    %296 = arith.negf %295 : vector<8x256xf32>
    %297 = math.exp %296 : vector<8x256xf32>
    %cst_110 = arith.constant 1.000000e+00 : f32
    %298 = vector.broadcast %cst_110 : f32 to vector<8x256xf32>
    %299 = arith.addf %298, %297 : vector<8x256xf32>
    %300 = arith.divf %298, %299 : vector<8x256xf32>
    %301 = vector.extract_strided_slice %300 {offsets = [0, 0], sizes = [8, 128], strides = [1, 1]} : vector<8x256xf32> to vector<8x128xf32>
    %302 = vector.extract_strided_slice %300 {offsets = [0, 128], sizes = [8, 128], strides = [1, 1]} : vector<8x256xf32> to vector<8x128xf32>
    %c0_111 = arith.constant 0 : index
    %c0_112 = arith.constant 0 : index
    %303 = vector.load %arg2[%c0_111, %c0_112] : memref<128x128xbf16, #tpu.memory_space<vmem>>, vector<128x128xbf16>
    %cst_113 = arith.constant dense<0.000000e+00> : vector<8x128xf32>
    %304 = tpu.matmul %291, %303, %cst_113 {dimension_numbers = #tpu.dot_dimension_numbers<[1], [0], [0], [1], [0, 0, 1, 1], [], []>} : vector<8x128xbf16>, vector<128x128xbf16>, vector<8x128xf32> -> vector<8x128xf32>
    %c0_114 = arith.constant 0 : index
    %c0_115 = arith.constant 0 : index
    %305 = vector.load %arg3[%c0_114, %c0_115] : memref<128x128xbf16, #tpu.memory_space<vmem>>, vector<128x128xbf16>
    %cst_116 = arith.constant dense<0.000000e+00> : vector<8x128xf32>
    %306 = tpu.matmul %261, %305, %cst_116 {dimension_numbers = #tpu.dot_dimension_numbers<[1], [0], [0], [1], [0, 0, 1, 1], [], []>} : vector<8x128xbf16>, vector<128x128xbf16>, vector<8x128xf32> -> vector<8x128xf32>
    %307 = arith.addf %304, %5 : vector<8x128xf32>
    %308 = arith.addf %306, %8 : vector<8x128xf32>
    %309 = arith.mulf %301, %308 : vector<8x128xf32>
    %310 = arith.addf %307, %309 : vector<8x128xf32>
    %311 = math.tanh %310 : vector<8x128xf32>
    %312 = arith.subf %260, %311 : vector<8x128xf32>
    %313 = arith.mulf %302, %312 : vector<8x128xf32>
    %314 = arith.addf %311, %313 : vector<8x128xf32>
    %315 = arith.truncf %314 : vector<8x128xf32> to vector<8x128xbf16>
    %c0_117 = arith.constant 0 : index
    %c0_118 = arith.constant 0 : index
    %316 = vector.load %arg7[%c0_117, %c0_118] : memref<128x128xbf16, #tpu.memory_space<vmem>>, vector<128x128xbf16>
    %cst_119 = arith.constant dense<0.000000e+00> : vector<8x128xf32>
    %317 = tpu.matmul %315, %316, %cst_119 {dimension_numbers = #tpu.dot_dimension_numbers<[1], [0], [0], [1], [0, 0, 1, 1], [], []>} : vector<8x128xbf16>, vector<128x128xbf16>, vector<8x128xf32> -> vector<8x128xf32>
    %318 = arith.addf %317, %11 : vector<8x128xf32>
    %319 = tpu.bitcast %318 : vector<8x128xf32> -> vector<8x128xi32>
    %c0_i32_120 = arith.constant 0 : i32
    %320 = vector.broadcast %c0_i32_120 : i32 to vector<8x128xi32>
    %321 = arith.cmpi sge, %319, %320 : vector<8x128xi32>
    %c2147483647_i32_121 = arith.constant 2147483647 : i32
    %322 = vector.broadcast %c2147483647_i32_121 : i32 to vector<8x128xi32>
    %323 = arith.xori %319, %322 : vector<8x128xi32>
    %324 = arith.select %321, %319, %323 : vector<8x128xi1>, vector<8x128xi32>
    %c-128_i32_122 = arith.constant -128 : i32
    %325 = vector.broadcast %c-128_i32_122 : i32 to vector<8x128xi32>
    %326 = arith.andi %324, %325 : vector<8x128xi32>
    %c127_i32_123 = arith.constant 127 : i32
    %327 = vector.broadcast %c127_i32_123 : i32 to vector<8x128xi32>
    %328 = arith.subi %327, %12 : vector<8x128xi32>
    %329 = arith.ori %326, %328 : vector<8x128xi32>
    %cst_124 = arith.constant dense<-2147483648> : vector<8xi32>
    %330 = vector.multi_reduction <maxsi>, %329, %cst_124 [1] : vector<8x128xi32> to vector<8xi32>
    %331 = vector.shape_cast %330 : vector<8xi32> to vector<8x1xi32>
    %c127_i32_125 = arith.constant 127 : i32
    %332 = vector.broadcast %c127_i32_125 : i32 to vector<8x1xi32>
    %333 = arith.andi %331, %332 : vector<8x1xi32>
    %c127_i32_126 = arith.constant 127 : i32
    %334 = vector.broadcast %c127_i32_126 : i32 to vector<8x1xi32>
    %335 = arith.subi %334, %333 : vector<8x1xi32>
    %c5_i32 = arith.constant 5 : i32
    %336 = vector.broadcast %c5_i32 : i32 to vector<8x128xi32>
    %337 = arith.cmpi eq, %13, %336 : vector<8x128xi32>
    %338 = vector.shape_cast %335 : vector<8x1xi32> to vector<8x1xi32>
    %339 = vector.broadcast %338 : vector<8x1xi32> to vector<8x128xi32>
    %340 = arith.select %337, %339, %286 : vector<8x128xi1>, vector<8x128xi32>
    %341 = vector.broadcast %335 : vector<8x1xi32> to vector<8x128xi32>
    %342 = arith.cmpi eq, %12, %341 : vector<8x128xi32>
    %343 = arith.extui %342 : vector<8x128xi1> to vector<8x128xi32>
    %344 = arith.sitofp %343 : vector<8x128xi32> to vector<8x128xf32>
    %345 = arith.truncf %344 : vector<8x128xf32> to vector<8x128xbf16>
    %346 = tpu.concatenate %345, %315 in 1 : vector<8x128xbf16>, vector<8x128xbf16> -> vector<8x256xbf16>
    %c0_127 = arith.constant 0 : index
    %c0_128 = arith.constant 0 : index
    %347 = vector.load %arg1[%c0_127, %c0_128] : memref<256x256xbf16, #tpu.memory_space<vmem>>, vector<256x256xbf16>
    %cst_129 = arith.constant dense<0.000000e+00> : vector<8x256xf32>
    %348 = tpu.matmul %346, %347, %cst_129 {dimension_numbers = #tpu.dot_dimension_numbers<[1], [0], [0], [1], [0, 0, 1, 1], [], []>} : vector<8x256xbf16>, vector<256x256xbf16>, vector<8x256xf32> -> vector<8x256xf32>
    %349 = arith.addf %348, %2 : vector<8x256xf32>
    %350 = arith.negf %349 : vector<8x256xf32>
    %351 = math.exp %350 : vector<8x256xf32>
    %cst_130 = arith.constant 1.000000e+00 : f32
    %352 = vector.broadcast %cst_130 : f32 to vector<8x256xf32>
    %353 = arith.addf %352, %351 : vector<8x256xf32>
    %354 = arith.divf %352, %353 : vector<8x256xf32>
    %355 = vector.extract_strided_slice %354 {offsets = [0, 0], sizes = [8, 128], strides = [1, 1]} : vector<8x256xf32> to vector<8x128xf32>
    %356 = vector.extract_strided_slice %354 {offsets = [0, 128], sizes = [8, 128], strides = [1, 1]} : vector<8x256xf32> to vector<8x128xf32>
    %c0_131 = arith.constant 0 : index
    %c0_132 = arith.constant 0 : index
    %357 = vector.load %arg2[%c0_131, %c0_132] : memref<128x128xbf16, #tpu.memory_space<vmem>>, vector<128x128xbf16>
    %cst_133 = arith.constant dense<0.000000e+00> : vector<8x128xf32>
    %358 = tpu.matmul %345, %357, %cst_133 {dimension_numbers = #tpu.dot_dimension_numbers<[1], [0], [0], [1], [0, 0, 1, 1], [], []>} : vector<8x128xbf16>, vector<128x128xbf16>, vector<8x128xf32> -> vector<8x128xf32>
    %c0_134 = arith.constant 0 : index
    %c0_135 = arith.constant 0 : index
    %359 = vector.load %arg3[%c0_134, %c0_135] : memref<128x128xbf16, #tpu.memory_space<vmem>>, vector<128x128xbf16>
    %cst_136 = arith.constant dense<0.000000e+00> : vector<8x128xf32>
    %360 = tpu.matmul %315, %359, %cst_136 {dimension_numbers = #tpu.dot_dimension_numbers<[1], [0], [0], [1], [0, 0, 1, 1], [], []>} : vector<8x128xbf16>, vector<128x128xbf16>, vector<8x128xf32> -> vector<8x128xf32>
    %361 = arith.addf %358, %5 : vector<8x128xf32>
    %362 = arith.addf %360, %8 : vector<8x128xf32>
    %363 = arith.mulf %355, %362 : vector<8x128xf32>
    %364 = arith.addf %361, %363 : vector<8x128xf32>
    %365 = math.tanh %364 : vector<8x128xf32>
    %366 = arith.subf %314, %365 : vector<8x128xf32>
    %367 = arith.mulf %356, %366 : vector<8x128xf32>
    %368 = arith.addf %365, %367 : vector<8x128xf32>
    %369 = arith.truncf %368 : vector<8x128xf32> to vector<8x128xbf16>
    %c0_137 = arith.constant 0 : index
    %c0_138 = arith.constant 0 : index
    %370 = vector.load %arg7[%c0_137, %c0_138] : memref<128x128xbf16, #tpu.memory_space<vmem>>, vector<128x128xbf16>
    %cst_139 = arith.constant dense<0.000000e+00> : vector<8x128xf32>
    %371 = tpu.matmul %369, %370, %cst_139 {dimension_numbers = #tpu.dot_dimension_numbers<[1], [0], [0], [1], [0, 0, 1, 1], [], []>} : vector<8x128xbf16>, vector<128x128xbf16>, vector<8x128xf32> -> vector<8x128xf32>
    %372 = arith.addf %371, %11 : vector<8x128xf32>
    %373 = tpu.bitcast %372 : vector<8x128xf32> -> vector<8x128xi32>
    %c0_i32_140 = arith.constant 0 : i32
    %374 = vector.broadcast %c0_i32_140 : i32 to vector<8x128xi32>
    %375 = arith.cmpi sge, %373, %374 : vector<8x128xi32>
    %c2147483647_i32_141 = arith.constant 2147483647 : i32
    %376 = vector.broadcast %c2147483647_i32_141 : i32 to vector<8x128xi32>
    %377 = arith.xori %373, %376 : vector<8x128xi32>
    %378 = arith.select %375, %373, %377 : vector<8x128xi1>, vector<8x128xi32>
    %c-128_i32_142 = arith.constant -128 : i32
    %379 = vector.broadcast %c-128_i32_142 : i32 to vector<8x128xi32>
    %380 = arith.andi %378, %379 : vector<8x128xi32>
    %c127_i32_143 = arith.constant 127 : i32
    %381 = vector.broadcast %c127_i32_143 : i32 to vector<8x128xi32>
    %382 = arith.subi %381, %12 : vector<8x128xi32>
    %383 = arith.ori %380, %382 : vector<8x128xi32>
    %cst_144 = arith.constant dense<-2147483648> : vector<8xi32>
    %384 = vector.multi_reduction <maxsi>, %383, %cst_144 [1] : vector<8x128xi32> to vector<8xi32>
    %385 = vector.shape_cast %384 : vector<8xi32> to vector<8x1xi32>
    %c127_i32_145 = arith.constant 127 : i32
    %386 = vector.broadcast %c127_i32_145 : i32 to vector<8x1xi32>
    %387 = arith.andi %385, %386 : vector<8x1xi32>
    %c127_i32_146 = arith.constant 127 : i32
    %388 = vector.broadcast %c127_i32_146 : i32 to vector<8x1xi32>
    %389 = arith.subi %388, %387 : vector<8x1xi32>
    %c6_i32 = arith.constant 6 : i32
    %390 = vector.broadcast %c6_i32 : i32 to vector<8x128xi32>
    %391 = arith.cmpi eq, %13, %390 : vector<8x128xi32>
    %392 = vector.shape_cast %389 : vector<8x1xi32> to vector<8x1xi32>
    %393 = vector.broadcast %392 : vector<8x1xi32> to vector<8x128xi32>
    %394 = arith.select %391, %393, %340 : vector<8x128xi1>, vector<8x128xi32>
    %395 = vector.broadcast %389 : vector<8x1xi32> to vector<8x128xi32>
    %396 = arith.cmpi eq, %12, %395 : vector<8x128xi32>
    %397 = arith.extui %396 : vector<8x128xi1> to vector<8x128xi32>
    %398 = arith.sitofp %397 : vector<8x128xi32> to vector<8x128xf32>
    %399 = arith.truncf %398 : vector<8x128xf32> to vector<8x128xbf16>
    %400 = tpu.concatenate %399, %369 in 1 : vector<8x128xbf16>, vector<8x128xbf16> -> vector<8x256xbf16>
    %c0_147 = arith.constant 0 : index
    %c0_148 = arith.constant 0 : index
    %401 = vector.load %arg1[%c0_147, %c0_148] : memref<256x256xbf16, #tpu.memory_space<vmem>>, vector<256x256xbf16>
    %cst_149 = arith.constant dense<0.000000e+00> : vector<8x256xf32>
    %402 = tpu.matmul %400, %401, %cst_149 {dimension_numbers = #tpu.dot_dimension_numbers<[1], [0], [0], [1], [0, 0, 1, 1], [], []>} : vector<8x256xbf16>, vector<256x256xbf16>, vector<8x256xf32> -> vector<8x256xf32>
    %403 = arith.addf %402, %2 : vector<8x256xf32>
    %404 = arith.negf %403 : vector<8x256xf32>
    %405 = math.exp %404 : vector<8x256xf32>
    %cst_150 = arith.constant 1.000000e+00 : f32
    %406 = vector.broadcast %cst_150 : f32 to vector<8x256xf32>
    %407 = arith.addf %406, %405 : vector<8x256xf32>
    %408 = arith.divf %406, %407 : vector<8x256xf32>
    %409 = vector.extract_strided_slice %408 {offsets = [0, 0], sizes = [8, 128], strides = [1, 1]} : vector<8x256xf32> to vector<8x128xf32>
    %410 = vector.extract_strided_slice %408 {offsets = [0, 128], sizes = [8, 128], strides = [1, 1]} : vector<8x256xf32> to vector<8x128xf32>
    %c0_151 = arith.constant 0 : index
    %c0_152 = arith.constant 0 : index
    %411 = vector.load %arg2[%c0_151, %c0_152] : memref<128x128xbf16, #tpu.memory_space<vmem>>, vector<128x128xbf16>
    %cst_153 = arith.constant dense<0.000000e+00> : vector<8x128xf32>
    %412 = tpu.matmul %399, %411, %cst_153 {dimension_numbers = #tpu.dot_dimension_numbers<[1], [0], [0], [1], [0, 0, 1, 1], [], []>} : vector<8x128xbf16>, vector<128x128xbf16>, vector<8x128xf32> -> vector<8x128xf32>
    %c0_154 = arith.constant 0 : index
    %c0_155 = arith.constant 0 : index
    %413 = vector.load %arg3[%c0_154, %c0_155] : memref<128x128xbf16, #tpu.memory_space<vmem>>, vector<128x128xbf16>
    %cst_156 = arith.constant dense<0.000000e+00> : vector<8x128xf32>
    %414 = tpu.matmul %369, %413, %cst_156 {dimension_numbers = #tpu.dot_dimension_numbers<[1], [0], [0], [1], [0, 0, 1, 1], [], []>} : vector<8x128xbf16>, vector<128x128xbf16>, vector<8x128xf32> -> vector<8x128xf32>
    %415 = arith.addf %412, %5 : vector<8x128xf32>
    %416 = arith.addf %414, %8 : vector<8x128xf32>
    %417 = arith.mulf %409, %416 : vector<8x128xf32>
    %418 = arith.addf %415, %417 : vector<8x128xf32>
    %419 = math.tanh %418 : vector<8x128xf32>
    %420 = arith.subf %368, %419 : vector<8x128xf32>
    %421 = arith.mulf %410, %420 : vector<8x128xf32>
    %422 = arith.addf %419, %421 : vector<8x128xf32>
    %423 = arith.truncf %422 : vector<8x128xf32> to vector<8x128xbf16>
    %c0_157 = arith.constant 0 : index
    %c0_158 = arith.constant 0 : index
    %424 = vector.load %arg7[%c0_157, %c0_158] : memref<128x128xbf16, #tpu.memory_space<vmem>>, vector<128x128xbf16>
    %cst_159 = arith.constant dense<0.000000e+00> : vector<8x128xf32>
    %425 = tpu.matmul %423, %424, %cst_159 {dimension_numbers = #tpu.dot_dimension_numbers<[1], [0], [0], [1], [0, 0, 1, 1], [], []>} : vector<8x128xbf16>, vector<128x128xbf16>, vector<8x128xf32> -> vector<8x128xf32>
    %426 = arith.addf %425, %11 : vector<8x128xf32>
    %427 = tpu.bitcast %426 : vector<8x128xf32> -> vector<8x128xi32>
    %c0_i32_160 = arith.constant 0 : i32
    %428 = vector.broadcast %c0_i32_160 : i32 to vector<8x128xi32>
    %429 = arith.cmpi sge, %427, %428 : vector<8x128xi32>
    %c2147483647_i32_161 = arith.constant 2147483647 : i32
    %430 = vector.broadcast %c2147483647_i32_161 : i32 to vector<8x128xi32>
    %431 = arith.xori %427, %430 : vector<8x128xi32>
    %432 = arith.select %429, %427, %431 : vector<8x128xi1>, vector<8x128xi32>
    %c-128_i32_162 = arith.constant -128 : i32
    %433 = vector.broadcast %c-128_i32_162 : i32 to vector<8x128xi32>
    %434 = arith.andi %432, %433 : vector<8x128xi32>
    %c127_i32_163 = arith.constant 127 : i32
    %435 = vector.broadcast %c127_i32_163 : i32 to vector<8x128xi32>
    %436 = arith.subi %435, %12 : vector<8x128xi32>
    %437 = arith.ori %434, %436 : vector<8x128xi32>
    %cst_164 = arith.constant dense<-2147483648> : vector<8xi32>
    %438 = vector.multi_reduction <maxsi>, %437, %cst_164 [1] : vector<8x128xi32> to vector<8xi32>
    %439 = vector.shape_cast %438 : vector<8xi32> to vector<8x1xi32>
    %c127_i32_165 = arith.constant 127 : i32
    %440 = vector.broadcast %c127_i32_165 : i32 to vector<8x1xi32>
    %441 = arith.andi %439, %440 : vector<8x1xi32>
    %c127_i32_166 = arith.constant 127 : i32
    %442 = vector.broadcast %c127_i32_166 : i32 to vector<8x1xi32>
    %443 = arith.subi %442, %441 : vector<8x1xi32>
    %c7_i32 = arith.constant 7 : i32
    %444 = vector.broadcast %c7_i32 : i32 to vector<8x128xi32>
    %445 = arith.cmpi eq, %13, %444 : vector<8x128xi32>
    %446 = vector.shape_cast %443 : vector<8x1xi32> to vector<8x1xi32>
    %447 = vector.broadcast %446 : vector<8x1xi32> to vector<8x128xi32>
    %448 = arith.select %445, %447, %394 : vector<8x128xi1>, vector<8x128xi32>
    %c0_167 = arith.constant 0 : index
    %c0_168 = arith.constant 0 : index
    %449 = vector.load %arg9[%c0_167, %c0_168] : memref<8x128xi32, #tpu.memory_space<vmem>>, vector<8x128xi32>
    tpu.vector_store %arg9[%c0_167, %c0_168], %448 {strides = array<i32>} : memref<8x128xi32, #tpu.memory_space<vmem>>, vector<8x128xi32>,
    return
  }
}

</mosaic_0001>

<llo_original>
// kernel: sampling_decode.1
$region0: #{sampling_decode.1}
  #allocation0 [shape = 'u32[]', space=smem, size = 0x4, offset = 0x4, fixed_abs, tag = 'smem constant byte address 0x4 - core index']
  #allocation1 [shape = 'u32[144,128]{1,0:T(1,128)}', space=vmem, size = 0x12000, scoped, tag = 'internal scratch']
  %s0 = inlined_call_operand.vmem [shape: f32[8,128], index: 0, kind: input, shape index: {}]
  %s1 = inlined_call_operand.vmem [shape: bf16[256,256], index: 1, kind: input, shape index: {}]
  %s2 = inlined_call_operand.vmem [shape: bf16[128,128], index: 2, kind: input, shape index: {}]
  %s3 = inlined_call_operand.vmem [shape: bf16[128,128], index: 3, kind: input, shape index: {}]
  %s4 = inlined_call_operand.vmem [shape: f32[1,256], index: 4, kind: input, shape index: {}]
  %s5 = inlined_call_operand.vmem [shape: f32[1,128], index: 5, kind: input, shape index: {}]
  %s6 = inlined_call_operand.vmem [shape: f32[1,128], index: 6, kind: input, shape index: {}]
  %s7 = inlined_call_operand.vmem [shape: bf16[128,128], index: 7, kind: input, shape index: {}]
  %s8 = inlined_call_operand.vmem [shape: f32[1,128], index: 8, kind: input, shape index: {}]
  %s9 = inlined_call_operand.vmem [shape: s32[8,128], index: 9, kind: output, shape index: {}]
  %s10 = sld [smem:[#allocation0]]
  $region46: #{sampling_decode.1} parent=0
    _
  %s12 = ssub.s32 1, %s10
  %s13 = scalar_select 0, %s12, %s10
  // Predicated region
  $region2: #{sampling_decode.1} parent=0 // pred_check
    _
  $region3: #{sampling_decode.1} parent=0 // pred_check_branch
    %15 = sbr.rel (0) target = $region5
  $region4: #{sampling_decode.1} parent=0 // pred_region
    _
  $region5: #{sampling_decode.1} parent=0 // pred_fallthru
    _
  // Predicated region
  $region6: #{sampling_decode.1} parent=0 // pred_check
    _
  $region7: #{sampling_decode.1} parent=0 // pred_check_branch
    %17 = sbr.rel (0) target = $region9
  $region8: #{sampling_decode.1} parent=0 // pred_region
    _
  $region9: #{sampling_decode.1} parent=0 // pred_fallthru
    _
  // Predicated region
  $region10: #{sampling_decode.1} parent=0 // pred_check
    _
  $region11: #{sampling_decode.1} parent=0 // pred_check_branch
    %19 = sbr.rel (0) target = $region13
  $region12: #{sampling_decode.1} parent=0 // pred_region
    _
  $region13: #{sampling_decode.1} parent=0 // pred_fallthru
    _
  // Predicated region
  $region14: #{sampling_decode.1} parent=0 // pred_check
    _
  $region15: #{sampling_decode.1} parent=0 // pred_check_branch
    %21 = sbr.rel (0) target = $region17
  $region16: #{sampling_decode.1} parent=0 // pred_region
    _
  $region17: #{sampling_decode.1} parent=0 // pred_fallthru
    _
  // Predicated region
  $region18: #{sampling_decode.1} parent=0 // pred_check
    _
  $region19: #{sampling_decode.1} parent=0 // pred_check_branch
    %23 = sbr.rel (0) target = $region21
  $region20: #{sampling_decode.1} parent=0 // pred_region
    _
  $region21: #{sampling_decode.1} parent=0 // pred_fallthru
    _
  // Predicated region
  $region22: #{sampling_decode.1} parent=0 // pred_check
    _
  $region23: #{sampling_decode.1} parent=0 // pred_check_branch
    %25 = sbr.rel (0) target = $region25
  $region24: #{sampling_decode.1} parent=0 // pred_region
    _
  $region25: #{sampling_decode.1} parent=0 // pred_fallthru
    _
  // Predicated region
  $region26: #{sampling_decode.1} parent=0 // pred_check
    _
  $region27: #{sampling_decode.1} parent=0 // pred_check_branch
    %27 = sbr.rel (0) target = $region29
  $region28: #{sampling_decode.1} parent=0 // pred_region
    _
  $region29: #{sampling_decode.1} parent=0 // pred_fallthru
    _
  // Predicated region
  $region30: #{sampling_decode.1} parent=0 // pred_check
    _
  $region31: #{sampling_decode.1} parent=0 // pred_check_branch
    %29 = sbr.rel (0) target = $region33
  $region32: #{sampling_decode.1} parent=0 // pred_region
    _
  $region33: #{sampling_decode.1} parent=0 // pred_fallthru
    _
  // Predicated region
  $region34: #{sampling_decode.1} parent=0 // pred_check
    _
  $region35: #{sampling_decode.1} parent=0 // pred_check_branch
    %31 = sbr.rel (0) target = $region37
  $region36: #{sampling_decode.1} parent=0 // pred_region
    _
  $region37: #{sampling_decode.1} parent=0 // pred_fallthru
    _
  %v33 = vld [vmem:[%s4] sm:$0x3]
  %v35 = vlaneseq
  %v36 = vshrl.u32 %v35, 7
  %v37 = vsub.s32 0, %v36
  %v38 = vrot.slane %v33, %v37
  %v39 = vlaneseq
  %v40 = vshrl.u32 %v39, 7
  %v41 = vsub.s32 1, %v40
  %v42 = vrot.slane %v33, %v41
  %v45 = vld [vmem:[%s5] sm:$0x1]
  %v47 = vlaneseq
  %v48 = vshrl.u32 %v47, 7
  %v49 = vsub.s32 0, %v48
  %v50 = vrot.slane %v45, %v49
  %v52 = vld [vmem:[%s6] sm:$0x1]
  %v54 = vlaneseq
  %v55 = vshrl.u32 %v54, 7
  %v56 = vsub.s32 0, %v55
  %v57 = vrot.slane %v52, %v56
  %v59 = vld [vmem:[%s8] sm:$0x1]
  %v61 = vlaneseq
  %v62 = vshrl.u32 %v61, 7
  %v63 = vsub.s32 0, %v62
  %v64 = vrot.slane %v59, %v63
  %v66 = vlaneseq
  %v67 = vand.u32 %v66, 127
  %v68 = vld [vmem:[%s0] sm:$0xff]
  %v69 = vpack.c.bf16 %v68, %v68
  %vm70 = vcmp.eq.s32.totalorder %v67, 1
  %v71 = vsel %vm70, 1, 0
  %v72 = vcvt.s32.f32 %v71
  %v73 = vpack.c.bf16 %v72, %v72
  %v74 = vld [vmem:[%s1] sm:$0xff]
  %v75 = vld [vmem:[%s1 + $0x8] sm:$0xff]
  %v76 = vld [vmem:[%s1 + $0x10] sm:$0xff]
  %v77 = vld [vmem:[%s1 + $0x18] sm:$0xff]
  %v78 = vld [vmem:[%s1 + $0x20] sm:$0xff]
  %v79 = vld [vmem:[%s1 + $0x28] sm:$0xff]
  %v80 = vld [vmem:[%s1 + $0x30] sm:$0xff]
  %v81 = vld [vmem:[%s1 + $0x38] sm:$0xff]
  %v82 = vld [vmem:[%s1 + $0x40] sm:$0xff]
  %v83 = vld [vmem:[%s1 + $0x48] sm:$0xff]
  %v84 = vld [vmem:[%s1 + $0x50] sm:$0xff]
  %v85 = vld [vmem:[%s1 + $0x58] sm:$0xff]
  %v86 = vld [vmem:[%s1 + $0x60] sm:$0xff]
  %v87 = vld [vmem:[%s1 + $0x68] sm:$0xff]
  %v88 = vld [vmem:[%s1 + $0x70] sm:$0xff]
  %v89 = vld [vmem:[%s1 + $0x78] sm:$0xff]
  %v90 = vld [vmem:[%s1 + $0x80] sm:$0xff]
  %v91 = vld [vmem:[%s1 + $0x88] sm:$0xff]
  %v92 = vld [vmem:[%s1 + $0x90] sm:$0xff]
  %v93 = vld [vmem:[%s1 + $0x98] sm:$0xff]
  %v94 = vld [vmem:[%s1 + $0xa0] sm:$0xff]
  %v95 = vld [vmem:[%s1 + $0xa8] sm:$0xff]
  %v96 = vld [vmem:[%s1 + $0xb0] sm:$0xff]
  %v97 = vld [vmem:[%s1 + $0xb8] sm:$0xff]
  %v98 = vld [vmem:[%s1 + $0xc0] sm:$0xff]
  %v99 = vld [vmem:[%s1 + $0xc8] sm:$0xff]
  %v100 = vld [vmem:[%s1 + $0xd0] sm:$0xff]
  %v101 = vld [vmem:[%s1 + $0xd8] sm:$0xff]
  %v102 = vld [vmem:[%s1 + $0xe0] sm:$0xff]
  %v103 = vld [vmem:[%s1 + $0xe8] sm:$0xff]
  %v104 = vld [vmem:[%s1 + $0xf0] sm:$0xff]
  %v105 = vld [vmem:[%s1 + $0xf8] sm:$0xff]
  %v138 = vunpack.c.l.b16 %v74
  %v139 = vunpack.c.h.b16 %v74
  %v140 = vunpack.c.l.b16 %v75
  %v141 = vunpack.c.h.b16 %v75
  %v142 = vunpack.c.l.b16 %v76
  %v143 = vunpack.c.h.b16 %v76
  %v144 = vunpack.c.l.b16 %v77
  %v145 = vunpack.c.h.b16 %v77
  %v146 = vunpack.c.l.b16 %v78
  %v147 = vunpack.c.h.b16 %v78
  %v148 = vunpack.c.l.b16 %v79
  %v149 = vunpack.c.h.b16 %v79
  %v150 = vunpack.c.l.b16 %v80
  %v151 = vunpack.c.h.b16 %v80
  %v152 = vunpack.c.l.b16 %v81
  %v153 = vunpack.c.h.b16 %v81
  %v154 = vunpack.c.l.b16 %v82
  %v155 = vunpack.c.h.b16 %v82
  %v156 = vunpack.c.l.b16 %v83
  %v157 = vunpack.c.h.b16 %v83
  %v158 = vunpack.c.l.b16 %v84
  %v159 = vunpack.c.h.b16 %v84
  %v160 = vunpack.c.l.b16 %v85
  %v161 = vunpack.c.h.b16 %v85
  %v162 = vunpack.c.l.b16 %v86
  %v163 = vunpack.c.h.b16 %v86
  %v164 = vunpack.c.l.b16 %v87
  %v165 = vunpack.c.h.b16 %v87
  %v166 = vunpack.c.l.b16 %v88
  %v167 = vunpack.c.h.b16 %v88
  %v168 = vunpack.c.l.b16 %v89
  %v169 = vunpack.c.h.b16 %v89
  %v170 = vunpack.c.l.b16 %v90
  %v171 = vunpack.c.h.b16 %v90
  %v172 = vunpack.c.l.b16 %v91
  %v173 = vunpack.c.h.b16 %v91
  %v174 = vunpack.c.l.b16 %v92
  %v175 = vunpack.c.h.b16 %v92
  %v176 = vunpack.c.l.b16 %v93
  %v177 = vunpack.c.h.b16 %v93
  %v178 = vunpack.c.l.b16 %v94
  %v179 = vunpack.c.h.b16 %v94
  %v180 = vunpack.c.l.b16 %v95
  %v181 = vunpack.c.h.b16 %v95
  %v182 = vunpack.c.l.b16 %v96
  %v183 = vunpack.c.h.b16 %v96
  %v184 = vunpack.c.l.b16 %v97
  %v185 = vunpack.c.h.b16 %v97
  %v186 = vunpack.c.l.b16 %v98
  %v187 = vunpack.c.h.b16 %v98
  %v188 = vunpack.c.l.b16 %v99
  %v189 = vunpack.c.h.b16 %v99
  %v190 = vunpack.c.l.b16 %v100
  %v191 = vunpack.c.h.b16 %v100
  %v192 = vunpack.c.l.b16 %v101
  %v193 = vunpack.c.h.b16 %v101
  %v194 = vunpack.c.l.b16 %v102
  %v195 = vunpack.c.h.b16 %v102
  %v196 = vunpack.c.l.b16 %v103
  %v197 = vunpack.c.h.b16 %v103
  %v198 = vunpack.c.l.b16 %v104
  %v199 = vunpack.c.h.b16 %v104
  %v200 = vunpack.c.l.b16 %v105
  %v201 = vunpack.c.h.b16 %v105
  %v202 = vpack.c.b16 %v140, %v138
  %v203 = vpack.c.b16 %v141, %v139
  %v204 = vpack.c.b16 %v144, %v142
  %v205 = vpack.c.b16 %v145, %v143
  %v206 = vpack.c.b16 %v148, %v146
  %v207 = vpack.c.b16 %v149, %v147
  %v208 = vpack.c.b16 %v152, %v150
  %v209 = vpack.c.b16 %v153, %v151
  %v210 = vpack.c.b16 %v156, %v154
  %v211 = vpack.c.b16 %v157, %v155
  %v212 = vpack.c.b16 %v160, %v158
  %v213 = vpack.c.b16 %v161, %v159
  %v214 = vpack.c.b16 %v164, %v162
  %v215 = vpack.c.b16 %v165, %v163
  %v216 = vpack.c.b16 %v168, %v166
  %v217 = vpack.c.b16 %v169, %v167
  %v218 = vpack.c.b16 %v172, %v170
  %v219 = vpack.c.b16 %v173, %v171
  %v220 = vpack.c.b16 %v176, %v174
  %v221 = vpack.c.b16 %v177, %v175
  %v222 = vpack.c.b16 %v180, %v178
  %v223 = vpack.c.b16 %v181, %v179
  %v224 = vpack.c.b16 %v184, %v182
  %v225 = vpack.c.b16 %v185, %v183
  %v226 = vpack.c.b16 %v188, %v186
  %v227 = vpack.c.b16 %v189, %v187
  %v228 = vpack.c.b16 %v192, %v190
  %v229 = vpack.c.b16 %v193, %v191
  %v230 = vpack.c.b16 %v196, %v194
  %v231 = vpack.c.b16 %v197, %v195
  %v232 = vpack.c.b16 %v200, %v198
  %v233 = vpack.c.b16 %v201, %v199
  %266 = vmatprep.subr.bf16.mxu0 %v203
  %267 = vmatpush1.bf16.msra.mxu0 %v202
  %268 = vmatprep.subr.bf16.mxu0 %v205
  %269 = vmatpush1.bf16.msra.mxu0 %v204
  %270 = vmatprep.subr.bf16.mxu0 %v207
  %271 = vmatpush1.bf16.msra.mxu0 %v206
  %272 = vmatprep.subr.bf16.mxu0 %v209
  %273 = vmatpush1.bf16.msra.mxu0 %v208
  %274 = vmatprep.subr.bf16.mxu0 %v211
  %275 = vmatpush1.bf16.msra.mxu0 %v210
  %276 = vmatprep.subr.bf16.mxu0 %v213
  %277 = vmatpush1.bf16.msra.mxu0 %v212
  %278 = vmatprep.subr.bf16.mxu0 %v215
  %279 = vmatpush1.bf16.msra.mxu0 %v214
  %280 = vmatprep.subr.bf16.mxu0 %v217
  %281 = vmatpush1.bf16.msra.mxu0 %v216
  %282 = vmatprep.subr.bf16.mxu0 %v219
  %283 = vmatpush1.bf16.msra.mxu0 %v218
  %284 = vmatprep.subr.bf16.mxu0 %v221
  %285 = vmatpush1.bf16.msra.mxu0 %v220
  %286 = vmatprep.subr.bf16.mxu0 %v223
  %287 = vmatpush1.bf16.msra.mxu0 %v222
  %288 = vmatprep.subr.bf16.mxu0 %v225
  %289 = vmatpush1.bf16.msra.mxu0 %v224
  %290 = vmatprep.subr.bf16.mxu0 %v227
  %291 = vmatpush1.bf16.msra.mxu0 %v226
  %292 = vmatprep.subr.bf16.mxu0 %v229
  %293 = vmatpush1.bf16.msra.mxu0 %v228
  %294 = vmatprep.subr.bf16.mxu0 %v231
  %295 = vmatpush1.bf16.msra.mxu0 %v230
  %296 = vmatprep.subr.bf16.mxu0 %v233
  %297 = vmatpush1.bf16.msra.mxu0 %v232
  %298 = vmatprep.mubr.bf16.mxu0 %v69
  %299 = vmatmul.mubr.bf16.gmra.mrb[0].mxu0 %v73
  %v300 = vpop.f32.mrb[0].mxu0
  %v301 = vadd.f32 %v38, %v300
  %v302 = vpop.f32.mrb[0].mxu0
  %v303 = vadd.f32 %v42, %v302
  %v304 = vpop.f32.mrb[0].mxu0
  %v305 = vpop.f32.mrb[0].mxu0
  %306 = vdwg.mxu0
  %v307 = vxor.u32 %v301, 2147483648
  %v308 = vxor.u32 %v303, 2147483648
  %v309 = vmul.f32 %v307, 1.442695
  %v310 = vpow.pop %v309
  %v311 = vmul.f32 %v308, 1.442695
  %v312 = vpow.pop %v311
  %v313 = vadd.f32 %v310, 1.0
  %v314 = vadd.f32 %v312, 1.0
  %v315 = vrcp.pop %v313
  %v316 = vmul.f32 1.0, %v315
  %v317 = vrcp.pop %v314
  %v318 = vmul.f32 1.0, %v317
  %v319 = vld [vmem:[%s2] sm:$0xf]
  %v320 = vld [vmem:[%s2 + $0x4] sm:$0xf]
  %v321 = vld [vmem:[%s2 + $0x8] sm:$0xf]
  %v322 = vld [vmem:[%s2 + $0xc] sm:$0xf]
  %v323 = vld [vmem:[%s2 + $0x10] sm:$0xf]
  %v324 = vld [vmem:[%s2 + $0x14] sm:$0xf]
  %v325 = vld [vmem:[%s2 + $0x18] sm:$0xf]
  %v326 = vld [vmem:[%s2 + $0x1c] sm:$0xf]
  %v327 = vld [vmem:[%s2 + $0x20] sm:$0xf]
  %v328 = vld [vmem:[%s2 + $0x24] sm:$0xf]
  %v329 = vld [vmem:[%s2 + $0x28] sm:$0xf]
  %v330 = vld [vmem:[%s2 + $0x2c] sm:$0xf]
  %v331 = vld [vmem:[%s2 + $0x30] sm:$0xf]
  %v332 = vld [vmem:[%s2 + $0x34] sm:$0xf]
  %v333 = vld [vmem:[%s2 + $0x38] sm:$0xf]
  %v334 = vld [vmem:[%s2 + $0x3c] sm:$0xf]
  %v335 = vld [vmem:[%s3] sm:$0xf]
  %v336 = vld [vmem:[%s3 + $0x4] sm:$0xf]
  %v337 = vld [vmem:[%s3 + $0x8] sm:$0xf]
  %v338 = vld [vmem:[%s3 + $0xc] sm:$0xf]
  %v339 = vld [vmem:[%s3 + $0x10] sm:$0xf]
  %v340 = vld [vmem:[%s3 + $0x14] sm:$0xf]
  %v341 = vld [vmem:[%s3 + $0x18] sm:$0xf]
  %v342 = vld [vmem:[%s3 + $0x1c] sm:$0xf]
  %v343 = vld [vmem:[%s3 + $0x20] sm:$0xf]
  %v344 = vld [vmem:[%s3 + $0x24] sm:$0xf]
  %v345 = vld [vmem:[%s3 + $0x28] sm:$0xf]
  %v346 = vld [vmem:[%s3 + $0x2c] sm:$0xf]
  %v347 = vld [vmem:[%s3 + $0x30] sm:$0xf]
  %v348 = vld [vmem:[%s3 + $0x34] sm:$0xf]
  %v349 = vld [vmem:[%s3 + $0x38] sm:$0xf]
  %v350 = vld [vmem:[%s3 + $0x3c] sm:$0xf]
  %v367 = vunpack.c.l.b16 %v319
  %v368 = vunpack.c.l.b16 %v320
  %v369 = vunpack.c.l.b16 %v321
  %v370 = vunpack.c.l.b16 %v322
  %v371 = vunpack.c.l.b16 %v323
  %v372 = vunpack.c.l.b16 %v324
  %v373 = vunpack.c.l.b16 %v325
  %v374 = vunpack.c.l.b16 %v326
  %v375 = vunpack.c.l.b16 %v327
  %v376 = vunpack.c.l.b16 %v328
  %v377 = vunpack.c.l.b16 %v329
  %v378 = vunpack.c.l.b16 %v330
  %v379 = vunpack.c.l.b16 %v331
  %v380 = vunpack.c.l.b16 %v332
  %v381 = vunpack.c.l.b16 %v333
  %v382 = vunpack.c.l.b16 %v334
  %v383 = vpack.c.b16 %v368, %v367
  %v384 = vpack.c.b16 %v370, %v369
  %v385 = vpack.c.b16 %v372, %v371
  %v386 = vpack.c.b16 %v374, %v373
  %v387 = vpack.c.b16 %v376, %v375
  %v388 = vpack.c.b16 %v378, %v377
  %v389 = vpack.c.b16 %v380, %v379
  %v390 = vpack.c.b16 %v382, %v381
  %399 = vmatprep.subr.bf16.mxu0 0
  %400 = vmatpush1.bf16.msra.mxu0 %v383
  %401 = vmatprep.subr.bf16.mxu0 0
  %402 = vmatpush1.bf16.msra.mxu0 %v384
  %403 = vmatprep.subr.bf16.mxu0 0
  %404 = vmatpush1.bf16.msra.mxu0 %v385
  %405 = vmatprep.subr.bf16.mxu0 0
  %406 = vmatpush1.bf16.msra.mxu0 %v386
  %407 = vmatprep.subr.bf16.mxu0 0
  %408 = vmatpush1.bf16.msra.mxu0 %v387
  %409 = vmatprep.subr.bf16.mxu0 0
  %410 = vmatpush1.bf16.msra.mxu0 %v388
  %411 = vmatprep.subr.bf16.mxu0 0
  %412 = vmatpush1.bf16.msra.mxu0 %v389
  %413 = vmatprep.subr.bf16.mxu0 0
  %414 = vmatpush1.bf16.msra.mxu0 %v390
  %415 = vmatprep.subr.bf16.mxu0 0
  %416 = vmatpush1.bf16.msra.mxu0 0
  %417 = vmatprep.subr.bf16.mxu0 0
  %418 = vmatpush1.bf16.msra.mxu0 0
  %419 = vmatprep.subr.bf16.mxu0 0
  %420 = vmatpush1.bf16.msra.mxu0 0
  %421 = vmatprep.subr.bf16.mxu0 0
  %422 = vmatpush1.bf16.msra.mxu0 0
  %423 = vmatprep.subr.bf16.mxu0 0
  %424 = vmatpush1.bf16.msra.mxu0 0
  %425 = vmatprep.subr.bf16.mxu0 0
  %426 = vmatpush1.bf16.msra.mxu0 0
  %427 = vmatprep.subr.bf16.mxu0 0
  %428 = vmatpush1.bf16.msra.mxu0 0
  %429 = vmatprep.subr.bf16.mxu0 0
  %430 = vmatpush1.bf16.msra.mxu0 0
  %431 = vmatprep.mubr.bf16.mxu0 0
  %432 = vmatmul.mubr.bf16.gmra.mrb[0].mxu0 %v73
  %v433 = vpop.f32.mrb[0].mxu0
  %v434 = vadd.f32 %v50, %v433
  %v435 = vpop.f32.mrb[0].mxu0
  %v436 = vpop.f32.mrb[0].mxu0
  %v437 = vpop.f32.mrb[0].mxu0
  %438 = vdwg.mxu0
  %v455 = vunpack.c.l.b16 %v335
  %v456 = vunpack.c.l.b16 %v336
  %v457 = vunpack.c.l.b16 %v337
  %v458 = vunpack.c.l.b16 %v338
  %v459 = vunpack.c.l.b16 %v339
  %v460 = vunpack.c.l.b16 %v340
  %v461 = vunpack.c.l.b16 %v341
  %v462 = vunpack.c.l.b16 %v342
  %v463 = vunpack.c.l.b16 %v343
  %v464 = vunpack.c.l.b16 %v344
  %v465 = vunpack.c.l.b16 %v345
  %v466 = vunpack.c.l.b16 %v346
  %v467 = vunpack.c.l.b16 %v347
  %v468 = vunpack.c.l.b16 %v348
  %v469 = vunpack.c.l.b16 %v349
  %v470 = vunpack.c.l.b16 %v350
  %v471 = vpack.c.b16 %v456, %v455
  %v472 = vpack.c.b16 %v458, %v457
  %v473 = vpack.c.b16 %v460, %v459
  %v474 = vpack.c.b16 %v462, %v461
  %v475 = vpack.c.b16 %v464, %v463
  %v476 = vpack.c.b16 %v466, %v465
  %v477 = vpack.c.b16 %v468, %v467
  %v478 = vpack.c.b16 %v470, %v469
  %487 = vmatprep.subr.bf16.mxu0 0
  %488 = vmatpush1.bf16.msra.mxu0 %v471
  %489 = vmatprep.subr.bf16.mxu0 0
  %490 = vmatpush1.bf16.msra.mxu0 %v472
  %491 = vmatprep.subr.bf16.mxu0 0
  %492 = vmatpush1.bf16.msra.mxu0 %v473
  %493 = vmatprep.subr.bf16.mxu0 0
  %494 = vmatpush1.bf16.msra.mxu0 %v474
  %495 = vmatprep.subr.bf16.mxu0 0
  %496 = vmatpush1.bf16.msra.mxu0 %v475
  %497 = vmatprep.subr.bf16.mxu0 0
  %498 = vmatpush1.bf16.msra.mxu0 %v476
  %499 = vmatprep.subr.bf16.mxu0 0
  %500 = vmatpush1.bf16.msra.mxu0 %v477
  %501 = vmatprep.subr.bf16.mxu0 0
  %502 = vmatpush1.bf16.msra.mxu0 %v478
  %503 = vmatprep.subr.bf16.mxu0 0
  %504 = vmatpush1.bf16.msra.mxu0 0
  %505 = vmatprep.subr.bf16.mxu0 0
  %506 = vmatpush1.bf16.msra.mxu0 0
  %507 = vmatprep.subr.bf16.mxu0 0
  %508 = vmatpush1.bf16.msra.mxu0 0
  %509 = vmatprep.subr.bf16.mxu0 0
  %510 = vmatpush1.bf16.msra.mxu0 0
  %511 = vmatprep.subr.bf16.mxu0 0
  %512 = vmatpush1.bf16.msra.mxu0 0
  %513 = vmatprep.subr.bf16.mxu0 0
  %514 = vmatpush1.bf16.msra.mxu0 0
  %515 = vmatprep.subr.bf16.mxu0 0
  %516 = vmatpush1.bf16.msra.mxu0 0
  %517 = vmatprep.subr.bf16.mxu0 0
  %518 = vmatpush1.bf16.msra.mxu0 0
  %519 = vmatprep.mubr.bf16.mxu0 0
  %520 = vmatmul.mubr.bf16.gmra.mrb[0].mxu0 %v69
  %v521 = vpop.f32.mrb[0].mxu0
  %v522 = vadd.f32 %v57, %v521
  %v523 = vpop.f32.mrb[0].mxu0
  %v524 = vpop.f32.mrb[0].mxu0
  %v525 = vpop.f32.mrb[0].mxu0
  %526 = vdwg.mxu0
  %v527 = vmul.f32 %v316, %v522
  %v528 = vadd.f32 %v434, %v527
  %v529 = vtanh.pop %v528
  %v530 = vsub.f32 %v68, %v529
  %v531 = vmul.f32 %v318, %v530
  %v532 = vadd.f32 %v529, %v531
  %v533 = vpack.c.bf16 %v532, %v532
  %v534 = vld [vmem:[%s7] sm:$0xf]
  %v535 = vld [vmem:[%s7 + $0x4] sm:$0xf]
  %v536 = vld [vmem:[%s7 + $0x8] sm:$0xf]
  %v537 = vld [vmem:[%s7 + $0xc] sm:$0xf]
  %v538 = vld [vmem:[%s7 + $0x10] sm:$0xf]
  %v539 = vld [vmem:[%s7 + $0x14] sm:$0xf]
  %v540 = vld [vmem:[%s7 + $0x18] sm:$0xf]
  %v541 = vld [vmem:[%s7 + $0x1c] sm:$0xf]
  %v542 = vld [vmem:[%s7 + $0x20] sm:$0xf]
  %v543 = vld [vmem:[%s7 + $0x24] sm:$0xf]
  %v544 = vld [vmem:[%s7 + $0x28] sm:$0xf]
  %v545 = vld [vmem:[%s7 + $0x2c] sm:$0xf]
  %v546 = vld [vmem:[%s7 + $0x30] sm:$0xf]
  %v547 = vld [vmem:[%s7 + $0x34] sm:$0xf]
  %v548 = vld [vmem:[%s7 + $0x38] sm:$0xf]
  %v549 = vld [vmem:[%s7 + $0x3c] sm:$0xf]
  %v566 = vunpack.c.l.b16 %v534
  %v567 = vunpack.c.l.b16 %v535
  %v568 = vunpack.c.l.b16 %v536
  %v569 = vunpack.c.l.b16 %v537
  %v570 = vunpack.c.l.b16 %v538
  %v571 = vunpack.c.l.b16 %v539
  %v572 = vunpack.c.l.b16 %v540
  %v573 = vunpack.c.l.b16 %v541
  %v574 = vunpack.c.l.b16 %v542
  %v575 = vunpack.c.l.b16 %v543
  %v576 = vunpack.c.l.b16 %v544
  %v577 = vunpack.c.l.b16 %v545
  %v578 = vunpack.c.l.b16 %v546
  %v579 = vunpack.c.l.b16 %v547
  %v580 = vunpack.c.l.b16 %v548
  %v581 = vunpack.c.l.b16 %v549
  %v582 = vpack.c.b16 %v567, %v566
  %v583 = vpack.c.b16 %v569, %v568
  %v584 = vpack.c.b16 %v571, %v570
  %v585 = vpack.c.b16 %v573, %v572
  %v586 = vpack.c.b16 %v575, %v574
  %v587 = vpack.c.b16 %v577, %v576
  %v588 = vpack.c.b16 %v579, %v578
  %v589 = vpack.c.b16 %v581, %v580
  %598 = vmatprep.subr.bf16.mxu0 0
  %599 = vmatpush1.bf16.msra.mxu0 %v582
  %600 = vmatprep.subr.bf16.mxu0 0
  %601 = vmatpush1.bf16.msra.mxu0 %v583
  %602 = vmatprep.subr.bf16.mxu0 0
  %603 = vmatpush1.bf16.msra.mxu0 %v584
  %604 = vmatprep.subr.bf16.mxu0 0
  %605 = vmatpush1.bf16.msra.mxu0 %v585
  %606 = vmatprep.subr.bf16.mxu0 0
  %607 = vmatpush1.bf16.msra.mxu0 %v586
  %608 = vmatprep.subr.bf16.mxu0 0
  %609 = vmatpush1.bf16.msra.mxu0 %v587
  %610 = vmatprep.subr.bf16.mxu0 0
  %611 = vmatpush1.bf16.msra.mxu0 %v588
  %612 = vmatprep.subr.bf16.mxu0 0
  %613 = vmatpush1.bf16.msra.mxu0 %v589
  %614 = vmatprep.subr.bf16.mxu0 0
  %615 = vmatpush1.bf16.msra.mxu0 0
  %616 = vmatprep.subr.bf16.mxu0 0
  %617 = vmatpush1.bf16.msra.mxu0 0
  %618 = vmatprep.subr.bf16.mxu0 0
  %619 = vmatpush1.bf16.msra.mxu0 0
  %620 = vmatprep.subr.bf16.mxu0 0
  %621 = vmatpush1.bf16.msra.mxu0 0
  %622 = vmatprep.subr.bf16.mxu0 0
  %623 = vmatpush1.bf16.msra.mxu0 0
  %624 = vmatprep.subr.bf16.mxu0 0
  %625 = vmatpush1.bf16.msra.mxu0 0
  %626 = vmatprep.subr.bf16.mxu0 0
  %627 = vmatpush1.bf16.msra.mxu0 0
  %628 = vmatprep.subr.bf16.mxu0 0
  %629 = vmatpush1.bf16.msra.mxu0 0
  %630 = vmatprep.mubr.bf16.mxu0 0
  %631 = vmatmul.mubr.bf16.gmra.mrb[0].mxu0 %v533
  %v632 = vpop.f32.mrb[0].mxu0
  %v633 = vadd.f32 %v64, %v632
  %v634 = vpop.f32.mrb[0].mxu0
  %v635 = vpop.f32.mrb[0].mxu0
  %v636 = vpop.f32.mrb[0].mxu0
  %637 = vdwg.mxu0
  %vm639 = vcmp.ge.s32.totalorder %v633, 0
  %v640 = vxor.u32 %v633, 2147483647
  %v641 = vsel %vm639, %v633, %v640
  %v642 = vand.u32 %v641, 4294967168
  %v643 = vsub.s32 127, %v67
  %v644 = vor.u32 %v642, %v643
  %v645 = vand.u32 %v644, 65535
  %v646 = vshra.s32 %v644, 16
  %v647 = vcvt.s32.f32 %v645
  %v648 = vcvt.s32.f32 %v646
  %649 = vmax.xlane.f32.xlu0 %v648
  %v650 = vpop.xlane.xlu0 %649
  %vm651 = vcmp.eq.f32.partialorder %v648, %v650
  %v652 = vsel %vm651, %v647, -inf
  %653 = vmax.xlane.f32.xlu0 %v652
  %v654 = vpop.xlane.xlu0 %653
  %v655 = vcvt.f32.s32 %v654
  %v656 = vcvt.f32.s32 %v650
  %v657 = vshll.u32 %v656, 16
  %v658 = vadd.s32 %v657, %v655
  %v659 = vand.u32 %v658, 127
  %v660 = vsub.s32 127, %v659
  %vm661 = vcmp.eq.s32.totalorder %v67, 0
  %v662 = vsel %vm661, %v660, 0
  %vm663 = vcmp.eq.s32.totalorder %v67, %v660
  %v664 = vsel %vm663, 1, 0
  %v665 = vcvt.s32.f32 %v664
  %v666 = vpack.c.bf16 %v665, %v665
  %667 = vmatprep.subr.bf16.mxu0 %v203
  %668 = vmatpush1.bf16.msra.mxu0 %v202
  %669 = vmatprep.subr.bf16.mxu0 %v205
  %670 = vmatpush1.bf16.msra.mxu0 %v204
  %671 = vmatprep.subr.bf16.mxu0 %v207
  %672 = vmatpush1.bf16.msra.mxu0 %v206
  %673 = vmatprep.subr.bf16.mxu0 %v209
  %674 = vmatpush1.bf16.msra.mxu0 %v208
  %675 = vmatprep.subr.bf16.mxu0 %v211
  %676 = vmatpush1.bf16.msra.mxu0 %v210
  %677 = vmatprep.subr.bf16.mxu0 %v213
  %678 = vmatpush1.bf16.msra.mxu0 %v212
  %679 = vmatprep.subr.bf16.mxu0 %v215
  %680 = vmatpush1.bf16.msra.mxu0 %v214
  %681 = vmatprep.subr.bf16.mxu0 %v217
  %682 = vmatpush1.bf16.msra.mxu0 %v216
  %683 = vmatprep.subr.bf16.mxu0 %v219
  %684 = vmatpush1.bf16.msra.mxu0 %v218
  %685 = vmatprep.subr.bf16.mxu0 %v221
  %686 = vmatpush1.bf16.msra.mxu0 %v220
  %687 = vmatprep.subr.bf16.mxu0 %v223
  %688 = vmatpush1.bf16.msra.mxu0 %v222
  %689 = vmatprep.subr.bf16.mxu0 %v225
  %690 = vmatpush1.bf16.msra.mxu0 %v224
  %691 = vmatprep.subr.bf16.mxu0 %v227
  %692 = vmatpush1.bf16.msra.mxu0 %v226
  %693 = vmatprep.subr.bf16.mxu0 %v229
  %694 = vmatpush1.bf16.msra.mxu0 %v228
  %695 = vmatprep.subr.bf16.mxu0 %v231
  %696 = vmatpush1.bf16.msra.mxu0 %v230
  %697 = vmatprep.subr.bf16.mxu0 %v233
  %698 = vmatpush1.bf16.msra.mxu0 %v232
  %699 = vmatprep.mubr.bf16.mxu0 %v533
  %700 = vmatmul.mubr.bf16.gmra.mrb[0].mxu0 %v666
  %v701 = vpop.f32.mrb[0].mxu0
  %v702 = vadd.f32 %v38, %v701
  %v703 = vpop.f32.mrb[0].mxu0
  %v704 = vadd.f32 %v42, %v703
  %v705 = vpop.f32.mrb[0].mxu0
  %v706 = vpop.f32.mrb[0].mxu0
  %707 = vdwg.mxu0
  %v708 = vxor.u32 %v702, 2147483648
  %v709 = vxor.u32 %v704, 2147483648
  %v710 = vmul.f32 %v708, 1.442695
  %v711 = vpow.pop %v710
  %v712 = vmul.f32 %v709, 1.442695
  %v713 = vpow.pop %v712
  %v714 = vadd.f32 %v711, 1.0
  %v715 = vadd.f32 %v713, 1.0
  %v716 = vrcp.pop %v714
  %v717 = vmul.f32 1.0, %v716
  %v718 = vrcp.pop %v715
  %v719 = vmul.f32 1.0, %v718
  %720 = vmatprep.subr.bf16.mxu0 0
  %721 = vmatpush1.bf16.msra.mxu0 %v383
  %722 = vmatprep.subr.bf16.mxu0 0
  %723 = vmatpush1.bf16.msra.mxu0 %v384
  %724 = vmatprep.subr.bf16.mxu0 0
  %725 = vmatpush1.bf16.msra.mxu0 %v385
  %726 = vmatprep.subr.bf16.mxu0 0
  %727 = vmatpush1.bf16.msra.mxu0 %v386
  %728 = vmatprep.subr.bf16.mxu0 0
  %729 = vmatpush1.bf16.msra.mxu0 %v387
  %730 = vmatprep.subr.bf16.mxu0 0
  %731 = vmatpush1.bf16.msra.mxu0 %v388
  %732 = vmatprep.subr.bf16.mxu0 0
  %733 = vmatpush1.bf16.msra.mxu0 %v389
  %734 = vmatprep.subr.bf16.mxu0 0
  %735 = vmatpush1.bf16.msra.mxu0 %v390
  %736 = vmatprep.subr.bf16.mxu0 0
  %737 = vmatpush1.bf16.msra.mxu0 0
  %738 = vmatprep.subr.bf16.mxu0 0
  %739 = vmatpush1.bf16.msra.mxu0 0
  %740 = vmatprep.subr.bf16.mxu0 0
  %741 = vmatpush1.bf16.msra.mxu0 0
  %742 = vmatprep.subr.bf16.mxu0 0
  %743 = vmatpush1.bf16.msra.mxu0 0
  %744 = vmatprep.subr.bf16.mxu0 0
  %745 = vmatpush1.bf16.msra.mxu0 0
  %746 = vmatprep.subr.bf16.mxu0 0
  %747 = vmatpush1.bf16.msra.mxu0 0
  %748 = vmatprep.subr.bf16.mxu0 0
  %749 = vmatpush1.bf16.msra.mxu0 0
  %750 = vmatprep.subr.bf16.mxu0 0
  %751 = vmatpush1.bf16.msra.mxu0 0
  %752 = vmatprep.mubr.bf16.mxu0 0
  %753 = vmatmul.mubr.bf16.gmra.mrb[0].mxu0 %v666
  %v754 = vpop.f32.mrb[0].mxu0
  %v755 = vadd.f32 %v50, %v754
  %v756 = vpop.f32.mrb[0].mxu0
  %v757 = vpop.f32.mrb[0].mxu0
  %v758 = vpop.f32.mrb[0].mxu0
  %759 = vdwg.mxu0
  %760 = vmatprep.subr.bf16.mxu0 0
  %761 = vmatpush1.bf16.msra.mxu0 %v471
  %762 = vmatprep.subr.bf16.mxu0 0
  %763 = vmatpush1.bf16.msra.mxu0 %v472
  %764 = vmatprep.subr.bf16.mxu0 0
  %765 = vmatpush1.bf16.msra.mxu0 %v473
  %766 = vmatprep.subr.bf16.mxu0 0
  %767 = vmatpush1.bf16.msra.mxu0 %v474
  %768 = vmatprep.subr.bf16.mxu0 0
  %769 = vmatpush1.bf16.msra.mxu0 %v475
  %770 = vmatprep.subr.bf16.mxu0 0
  %771 = vmatpush1.bf16.msra.mxu0 %v476
  %772 = vmatprep.subr.bf16.mxu0 0
  %773 = vmatpush1.bf16.msra.mxu0 %v477
  %774 = vmatprep.subr.bf16.mxu0 0
  %775 = vmatpush1.bf16.msra.mxu0 %v478
  %776 = vmatprep.subr.bf16.mxu0 0
  %777 = vmatpush1.bf16.msra.mxu0 0
  %778 = vmatprep.subr.bf16.mxu0 0
  %779 = vmatpush1.bf16.msra.mxu0 0
  %780 = vmatprep.subr.bf16.mxu0 0
  %781 = vmatpush1.bf16.msra.mxu0 0
  %782 = vmatprep.subr.bf16.mxu0 0
  %783 = vmatpush1.bf16.msra.mxu0 0
  %784 = vmatprep.subr.bf16.mxu0 0
  %785 = vmatpush1.bf16.msra.mxu0 0
  %786 = vmatprep.subr.bf16.mxu0 0
  %787 = vmatpush1.bf16.msra.mxu0 0
  %788 = vmatprep.subr.bf16.mxu0 0
  %789 = vmatpush1.bf16.msra.mxu0 0
  %790 = vmatprep.subr.bf16.mxu0 0
  %791 = vmatpush1.bf16.msra.mxu0 0
  %792 = vmatprep.mubr.bf16.mxu0 0
  %793 = vmatmul.mubr.bf16.gmra.mrb[0].mxu0 %v533
  %v794 = vpop.f32.mrb[0].mxu0
  %v795 = vadd.f32 %v57, %v794
  %v796 = vpop.f32.mrb[0].mxu0
  %v797 = vpop.f32.mrb[0].mxu0
  %v798 = vpop.f32.mrb[0].mxu0
  %799 = vdwg.mxu0
  %v800 = vmul.f32 %v717, %v795
  %v801 = vadd.f32 %v755, %v800
  %v802 = vtanh.pop %v801
  %v803 = vsub.f32 %v532, %v802
  %v804 = vmul.f32 %v719, %v803
  %v805 = vadd.f32 %v802, %v804
  %v806 = vpack.c.bf16 %v805, %v805
  %807 = vmatprep.subr.bf16.mxu0 0
  %808 = vmatpush1.bf16.msra.mxu0 %v582
  %809 = vmatprep.subr.bf16.mxu0 0
  %810 = vmatpush1.bf16.msra.mxu0 %v583
  %811 = vmatprep.subr.bf16.mxu0 0
  %812 = vmatpush1.bf16.msra.mxu0 %v584
  %813 = vmatprep.subr.bf16.mxu0 0
  %814 = vmatpush1.bf16.msra.mxu0 %v585
  %815 = vmatprep.subr.bf16.mxu0 0
  %816 = vmatpush1.bf16.msra.mxu0 %v586
  %817 = vmatprep.subr.bf16.mxu0 0
  %818 = vmatpush1.bf16.msra.mxu0 %v587
  %819 = vmatprep.subr.bf16.mxu0 0
  %820 = vmatpush1.bf16.msra.mxu0 %v588
  %821 = vmatprep.subr.bf16.mxu0 0
  %822 = vmatpush1.bf16.msra.mxu0 %v589
  %823 = vmatprep.subr.bf16.mxu0 0
  %824 = vmatpush1.bf16.msra.mxu0 0
  %825 = vmatprep.subr.bf16.mxu0 0
  %826 = vmatpush1.bf16.msra.mxu0 0
  %827 = vmatprep.subr.bf16.mxu0 0
  %828 = vmatpush1.bf16.msra.mxu0 0
  %829 = vmatprep.subr.bf16.mxu0 0
  %830 = vmatpush1.bf16.msra.mxu0 0
  %831 = vmatprep.subr.bf16.mxu0 0
  %832 = vmatpush1.bf16.msra.mxu0 0
  %833 = vmatprep.subr.bf16.mxu0 0
  %834 = vmatpush1.bf16.msra.mxu0 0
  %835 = vmatprep.subr.bf16.mxu0 0
  %836 = vmatpush1.bf16.msra.mxu0 0
  %837 = vmatprep.subr.bf16.mxu0 0
  %838 = vmatpush1.bf16.msra.mxu0 0
  %839 = vmatprep.mubr.bf16.mxu0 0
  %840 = vmatmul.mubr.bf16.gmra.mrb[0].mxu0 %v806
  %v841 = vpop.f32.mrb[0].mxu0
  %v842 = vadd.f32 %v64, %v841
  %v843 = vpop.f32.mrb[0].mxu0
  %v844 = vpop.f32.mrb[0].mxu0
  %v845 = vpop.f32.mrb[0].mxu0
  %846 = vdwg.mxu0
  %vm848 = vcmp.ge.s32.totalorder %v842, 0
  %v849 = vxor.u32 %v842, 2147483647
  %v850 = vsel %vm848, %v842, %v849
  %v851 = vand.u32 %v850, 4294967168
  %v852 = vor.u32 %v851, %v643
  %v853 = vand.u32 %v852, 65535
  %v854 = vshra.s32 %v852, 16
  %v855 = vcvt.s32.f32 %v853
  %v856 = vcvt.s32.f32 %v854
  %857 = vmax.xlane.f32.xlu0 %v856
  %v858 = vpop.xlane.xlu0 %857
  %vm859 = vcmp.eq.f32.partialorder %v856, %v858
  %v860 = vsel %vm859, %v855, -inf
  %861 = vmax.xlane.f32.xlu0 %v860
  %v862 = vpop.xlane.xlu0 %861
  %v863 = vcvt.f32.s32 %v862
  %v864 = vcvt.f32.s32 %v858
  %v865 = vshll.u32 %v864, 16
  %v866 = vadd.s32 %v865, %v863
  %v867 = vand.u32 %v866, 127
  %v868 = vsub.s32 127, %v867
  %v869 = vsel %vm70, %v868, %v662
  %vm870 = vcmp.eq.s32.totalorder %v67, %v868
  %v871 = vsel %vm870, 1, 0
  %v872 = vcvt.s32.f32 %v871
  %v873 = vpack.c.bf16 %v872, %v872
  %874 = vmatprep.subr.bf16.mxu0 %v203
  %875 = vmatpush1.bf16.msra.mxu0 %v202
  %876 = vmatprep.subr.bf16.mxu0 %v205
  %877 = vmatpush1.bf16.msra.mxu0 %v204
  %878 = vmatprep.subr.bf16.mxu0 %v207
  %879 = vmatpush1.bf16.msra.mxu0 %v206
  %880 = vmatprep.subr.bf16.mxu0 %v209
  %881 = vmatpush1.bf16.msra.mxu0 %v208
  %882 = vmatprep.subr.bf16.mxu0 %v211
  %883 = vmatpush1.bf16.msra.mxu0 %v210
  %884 = vmatprep.subr.bf16.mxu0 %v213
  %885 = vmatpush1.bf16.msra.mxu0 %v212
  %886 = vmatprep.subr.bf16.mxu0 %v215
  %887 = vmatpush1.bf16.msra.mxu0 %v214
  %888 = vmatprep.subr.bf16.mxu0 %v217
  %889 = vmatpush1.bf16.msra.mxu0 %v216
  %890 = vmatprep.subr.bf16.mxu0 %v219
  %891 = vmatpush1.bf16.msra.mxu0 %v218
  %892 = vmatprep.subr.bf16.mxu0 %v221
  %893 = vmatpush1.bf16.msra.mxu0 %v220
  %894 = vmatprep.subr.bf16.mxu0 %v223
  %895 = vmatpush1.bf16.msra.mxu0 %v222
  %896 = vmatprep.subr.bf16.mxu0 %v225
  %897 = vmatpush1.bf16.msra.mxu0 %v224
  %898 = vmatprep.subr.bf16.mxu0 %v227
  %899 = vmatpush1.bf16.msra.mxu0 %v226
  %900 = vmatprep.subr.bf16.mxu0 %v229
  %901 = vmatpush1.bf16.msra.mxu0 %v228
  %902 = vmatprep.subr.bf16.mxu0 %v231
  %903 = vmatpush1.bf16.msra.mxu0 %v230
  %904 = vmatprep.subr.bf16.mxu0 %v233
  %905 = vmatpush1.bf16.msra.mxu0 %v232
  %906 = vmatprep.mubr.bf16.mxu0 %v806
  %907 = vmatmul.mubr.bf16.gmra.mrb[0].mxu0 %v873
  %v908 = vpop.f32.mrb[0].mxu0
  %v909 = vadd.f32 %v38, %v908
  %v910 = vpop.f32.mrb[0].mxu0
  %v911 = vadd.f32 %v42, %v910
  %v912 = vpop.f32.mrb[0].mxu0
  %v913 = vpop.f32.mrb[0].mxu0
  %914 = vdwg.mxu0
  %v915 = vxor.u32 %v909, 2147483648
  %v916 = vxor.u32 %v911, 2147483648
  %v917 = vmul.f32 %v915, 1.442695
  %v918 = vpow.pop %v917
  %v919 = vmul.f32 %v916, 1.442695
  %v920 = vpow.pop %v919
  %v921 = vadd.f32 %v918, 1.0
  %v922 = vadd.f32 %v920, 1.0
  %v923 = vrcp.pop %v921
  %v924 = vmul.f32 1.0, %v923
  %v925 = vrcp.pop %v922
  %v926 = vmul.f32 1.0, %v925
  %927 = vmatprep.subr.bf16.mxu0 0
  %928 = vmatpush1.bf16.msra.mxu0 %v383
  %929 = vmatprep.subr.bf16.mxu0 0
  %930 = vmatpush1.bf16.msra.mxu0 %v384
  %931 = vmatprep.subr.bf16.mxu0 0
  %932 = vmatpush1.bf16.msra.mxu0 %v385
  %933 = vmatprep.subr.bf16.mxu0 0
  %934 = vmatpush1.bf16.msra.mxu0 %v386
  %935 = vmatprep.subr.bf16.mxu0 0
  %936 = vmatpush1.bf16.msra.mxu0 %v387
  %937 = vmatprep.subr.bf16.mxu0 0
  %938 = vmatpush1.bf16.msra.mxu0 %v388
  %939 = vmatprep.subr.bf16.mxu0 0
  %940 = vmatpush1.bf16.msra.mxu0 %v389
  %941 = vmatprep.subr.bf16.mxu0 0
  %942 = vmatpush1.bf16.msra.mxu0 %v390
  %943 = vmatprep.subr.bf16.mxu0 0
  %944 = vmatpush1.bf16.msra.mxu0 0
  %945 = vmatprep.subr.bf16.mxu0 0
  %946 = vmatpush1.bf16.msra.mxu0 0
  %947 = vmatprep.subr.bf16.mxu0 0
  %948 = vmatpush1.bf16.msra.mxu0 0
  %949 = vmatprep.subr.bf16.mxu0 0
  %950 = vmatpush1.bf16.msra.mxu0 0
  %951 = vmatprep.subr.bf16.mxu0 0
  %952 = vmatpush1.bf16.msra.mxu0 0
  %953 = vmatprep.subr.bf16.mxu0 0
  %954 = vmatpush1.bf16.msra.mxu0 0
  %955 = vmatprep.subr.bf16.mxu0 0
  %956 = vmatpush1.bf16.msra.mxu0 0
  %957 = vmatprep.subr.bf16.mxu0 0
  %958 = vmatpush1.bf16.msra.mxu0 0
  %959 = vmatprep.mubr.bf16.mxu0 0
  %960 = vmatmul.mubr.bf16.gmra.mrb[0].mxu0 %v873
  %v961 = vpop.f32.mrb[0].mxu0
  %v962 = vadd.f32 %v50, %v961
  %v963 = vpop.f32.mrb[0].mxu0
  %v964 = vpop.f32.mrb[0].mxu0
  %v965 = vpop.f32.mrb[0].mxu0
  %966 = vdwg.mxu0
  %967 = vmatprep.subr.bf16.mxu0 0
  %968 = vmatpush1.bf16.msra.mxu0 %v471
  %969 = vmatprep.subr.bf16.mxu0 0
  %970 = vmatpush1.bf16.msra.mxu0 %v472
  %971 = vmatprep.subr.bf16.mxu0 0
  %972 = vmatpush1.bf16.msra.mxu0 %v473
  %973 = vmatprep.subr.bf16.mxu0 0
  %974 = vmatpush1.bf16.msra.mxu0 %v474
  %975 = vmatprep.subr.bf16.mxu0 0
  %976 = vmatpush1.bf16.msra.mxu0 %v475
  %977 = vmatprep.subr.bf16.mxu0 0
  %978 = vmatpush1.bf16.msra.mxu0 %v476
  %979 = vmatprep.subr.bf16.mxu0 0
  %980 = vmatpush1.bf16.msra.mxu0 %v477
  %981 = vmatprep.subr.bf16.mxu0 0
  %982 = vmatpush1.bf16.msra.mxu0 %v478
  %983 = vmatprep.subr.bf16.mxu0 0
  %984 = vmatpush1.bf16.msra.mxu0 0
  %985 = vmatprep.subr.bf16.mxu0 0
  %986 = vmatpush1.bf16.msra.mxu0 0
  %987 = vmatprep.subr.bf16.mxu0 0
  %988 = vmatpush1.bf16.msra.mxu0 0
  %989 = vmatprep.subr.bf16.mxu0 0
  %990 = vmatpush1.bf16.msra.mxu0 0
  %991 = vmatprep.subr.bf16.mxu0 0
  %992 = vmatpush1.bf16.msra.mxu0 0
  %993 = vmatprep.subr.bf16.mxu0 0
  %994 = vmatpush1.bf16.msra.mxu0 0
  %995 = vmatprep.subr.bf16.mxu0 0
  %996 = vmatpush1.bf16.msra.mxu0 0
  %997 = vmatprep.subr.bf16.mxu0 0
  %998 = vmatpush1.bf16.msra.mxu0 0
  %999 = vmatprep.mubr.bf16.mxu0 0
  %1000 = vmatmul.mubr.bf16.gmra.mrb[0].mxu0 %v806
  %v1001 = vpop.f32.mrb[0].mxu0
  %v1002 = vadd.f32 %v57, %v1001
  %v1003 = vpop.f32.mrb[0].mxu0
  %v1004 = vpop.f32.mrb[0].mxu0
  %v1005 = vpop.f32.mrb[0].mxu0
  %1006 = vdwg.mxu0
  %v1007 = vmul.f32 %v924, %v1002
  %v1008 = vadd.f32 %v962, %v1007
  %v1009 = vtanh.pop %v1008
  %v1010 = vsub.f32 %v805, %v1009
  %v1011 = vmul.f32 %v926, %v1010
  %v1012 = vadd.f32 %v1009, %v1011
  %v1013 = vpack.c.bf16 %v1012, %v1012
  %1014 = vmatprep.subr.bf16.mxu0 0
  %1015 = vmatpush1.bf16.msra.mxu0 %v582
  %1016 = vmatprep.subr.bf16.mxu0 0
  %1017 = vmatpush1.bf16.msra.mxu0 %v583
  %1018 = vmatprep.subr.bf16.mxu0 0
  %1019 = vmatpush1.bf16.msra.mxu0 %v584
  %1020 = vmatprep.subr.bf16.mxu0 0
  %1021 = vmatpush1.bf16.msra.mxu0 %v585
  %1022 = vmatprep.subr.bf16.mxu0 0
  %1023 = vmatpush1.bf16.msra.mxu0 %v586
  %1024 = vmatprep.subr.bf16.mxu0 0
  %1025 = vmatpush1.bf16.msra.mxu0 %v587
  %1026 = vmatprep.subr.bf16.mxu0 0
  %1027 = vmatpush1.bf16.msra.mxu0 %v588
  %1028 = vmatprep.subr.bf16.mxu0 0
  %1029 = vmatpush1.bf16.msra.mxu0 %v589
  %1030 = vmatprep.subr.bf16.mxu0 0
  %1031 = vmatpush1.bf16.msra.mxu0 0
  %1032 = vmatprep.subr.bf16.mxu0 0
  %1033 = vmatpush1.bf16.msra.mxu0 0
  %1034 = vmatprep.subr.bf16.mxu0 0
  %1035 = vmatpush1.bf16.msra.mxu0 0
  %1036 = vmatprep.subr.bf16.mxu0 0
  %1037 = vmatpush1.bf16.msra.mxu0 0
  %1038 = vmatprep.subr.bf16.mxu0 0
  %1039 = vmatpush1.bf16.msra.mxu0 0
  %1040 = vmatprep.subr.bf16.mxu0 0
  %1041 = vmatpush1.bf16.msra.mxu0 0
  %1042 = vmatprep.subr.bf16.mxu0 0
  %1043 = vmatpush1.bf16.msra.mxu0 0
  %1044 = vmatprep.subr.bf16.mxu0 0
  %1045 = vmatpush1.bf16.msra.mxu0 0
  %1046 = vmatprep.mubr.bf16.mxu0 0
  %1047 = vmatmul.mubr.bf16.gmra.mrb[0].mxu0 %v1013
  %v1048 = vpop.f32.mrb[0].mxu0
  %v1049 = vadd.f32 %v64, %v1048
  %v1050 = vpop.f32.mrb[0].mxu0
  %v1051 = vpop.f32.mrb[0].mxu0
  %v1052 = vpop.f32.mrb[0].mxu0
  %1053 = vdwg.mxu0
  %vm1055 = vcmp.ge.s32.totalorder %v1049, 0
  %v1056 = vxor.u32 %v1049, 2147483647
  %v1057 = vsel %vm1055, %v1049, %v1056
  %v1058 = vand.u32 %v1057, 4294967168
  %v1059 = vor.u32 %v1058, %v643
  %v1060 = vand.u32 %v1059, 65535
  %v1061 = vshra.s32 %v1059, 16
  %v1062 = vcvt.s32.f32 %v1060
  %v1063 = vcvt.s32.f32 %v1061
  %1064 = vmax.xlane.f32.xlu0 %v1063
  %v1065 = vpop.xlane.xlu0 %1064
  %vm1066 = vcmp.eq.f32.partialorder %v1063, %v1065
  %v1067 = vsel %vm1066, %v1062, -inf
  %1068 = vmax.xlane.f32.xlu0 %v1067
  %v1069 = vpop.xlane.xlu0 %1068
  %v1070 = vcvt.f32.s32 %v1069
  %v1071 = vcvt.f32.s32 %v1065
  %v1072 = vshll.u32 %v1071, 16
  %v1073 = vadd.s32 %v1072, %v1070
  %v1074 = vand.u32 %v1073, 127
  %v1075 = vsub.s32 127, %v1074
  %vm1076 = vcmp.eq.s32.totalorder %v67, 2
  %v1077 = vsel %vm1076, %v1075, %v869
  %vm1078 = vcmp.eq.s32.totalorder %v67, %v1075
  %v1079 = vsel %vm1078, 1, 0
  %v1080 = vcvt.s32.f32 %v1079
  %v1081 = vpack.c.bf16 %v1080, %v1080
  %1082 = vmatprep.subr.bf16.mxu0 %v203
  %1083 = vmatpush1.bf16.msra.mxu0 %v202
  %1084 = vmatprep.subr.bf16.mxu0 %v205
  %1085 = vmatpush1.bf16.msra.mxu0 %v204
  %1086 = vmatprep.subr.bf16.mxu0 %v207
  %1087 = vmatpush1.bf16.msra.mxu0 %v206
  %1088 = vmatprep.subr.bf16.mxu0 %v209
  %1089 = vmatpush1.bf16.msra.mxu0 %v208
  %1090 = vmatprep.subr.bf16.mxu0 %v211
  %1091 = vmatpush1.bf16.msra.mxu0 %v210
  %1092 = vmatprep.subr.bf16.mxu0 %v213
  %1093 = vmatpush1.bf16.msra.mxu0 %v212
  %1094 = vmatprep.subr.bf16.mxu0 %v215
  %1095 = vmatpush1.bf16.msra.mxu0 %v214
  %1096 = vmatprep.subr.bf16.mxu0 %v217
  %1097 = vmatpush1.bf16.msra.mxu0 %v216
  %1098 = vmatprep.subr.bf16.mxu0 %v219
  %1099 = vmatpush1.bf16.msra.mxu0 %v218
  %1100 = vmatprep.subr.bf16.mxu0 %v221
  %1101 = vmatpush1.bf16.msra.mxu0 %v220
  %1102 = vmatprep.subr.bf16.mxu0 %v223
  %1103 = vmatpush1.bf16.msra.mxu0 %v222
  %1104 = vmatprep.subr.bf16.mxu0 %v225
  %1105 = vmatpush1.bf16.msra.mxu0 %v224
  %1106 = vmatprep.subr.bf16.mxu0 %v227
  %1107 = vmatpush1.bf16.msra.mxu0 %v226
  %1108 = vmatprep.subr.bf16.mxu0 %v229
  %1109 = vmatpush1.bf16.msra.mxu0 %v228
  %1110 = vmatprep.subr.bf16.mxu0 %v231
  %1111 = vmatpush1.bf16.msra.mxu0 %v230
  %1112 = vmatprep.subr.bf16.mxu0 %v233
  %1113 = vmatpush1.bf16.msra.mxu0 %v232
  %1114 = vmatprep.mubr.bf16.mxu0 %v1013
  %1115 = vmatmul.mubr.bf16.gmra.mrb[0].mxu0 %v1081
  %v1116 = vpop.f32.mrb[0].mxu0
  %v1117 = vadd.f32 %v38, %v1116
  %v1118 = vpop.f32.mrb[0].mxu0
  %v1119 = vadd.f32 %v42, %v1118
  %v1120 = vpop.f32.mrb[0].mxu0
  %v1121 = vpop.f32.mrb[0].mxu0
  %1122 = vdwg.mxu0
  %v1123 = vxor.u32 %v1117, 2147483648
  %v1124 = vxor.u32 %v1119, 2147483648
  %v1125 = vmul.f32 %v1123, 1.442695
  %v1126 = vpow.pop %v1125
  %v1127 = vmul.f32 %v1124, 1.442695
  %v1128 = vpow.pop %v1127
  %v1129 = vadd.f32 %v1126, 1.0
  %v1130 = vadd.f32 %v1128, 1.0
  %v1131 = vrcp.pop %v1129
  %v1132 = vmul.f32 1.0, %v1131
  %v1133 = vrcp.pop %v1130
  %v1134 = vmul.f32 1.0, %v1133
  %1135 = vmatprep.subr.bf16.mxu0 0
  %1136 = vmatpush1.bf16.msra.mxu0 %v383
  %1137 = vmatprep.subr.bf16.mxu0 0
  %1138 = vmatpush1.bf16.msra.mxu0 %v384
  %1139 = vmatprep.subr.bf16.mxu0 0
  %1140 = vmatpush1.bf16.msra.mxu0 %v385
  %1141 = vmatprep.subr.bf16.mxu0 0
  %1142 = vmatpush1.bf16.msra.mxu0 %v386
  %1143 = vmatprep.subr.bf16.mxu0 0
  %1144 = vmatpush1.bf16.msra.mxu0 %v387
  %1145 = vmatprep.subr.bf16.mxu0 0
  %1146 = vmatpush1.bf16.msra.mxu0 %v388
  %1147 = vmatprep.subr.bf16.mxu0 0
  %1148 = vmatpush1.bf16.msra.mxu0 %v389
  %1149 = vmatprep.subr.bf16.mxu0 0
  %1150 = vmatpush1.bf16.msra.mxu0 %v390
  %1151 = vmatprep.subr.bf16.mxu0 0
  %1152 = vmatpush1.bf16.msra.mxu0 0
  %1153 = vmatprep.subr.bf16.mxu0 0
  %1154 = vmatpush1.bf16.msra.mxu0 0
  %1155 = vmatprep.subr.bf16.mxu0 0
  %1156 = vmatpush1.bf16.msra.mxu0 0
  %1157 = vmatprep.subr.bf16.mxu0 0
  %1158 = vmatpush1.bf16.msra.mxu0 0
  %1159 = vmatprep.subr.bf16.mxu0 0
  %1160 = vmatpush1.bf16.msra.mxu0 0
  %1161 = vmatprep.subr.bf16.mxu0 0
  %1162 = vmatpush1.bf16.msra.mxu0 0
  %1163 = vmatprep.subr.bf16.mxu0 0
  %1164 = vmatpush1.bf16.msra.mxu0 0
  %1165 = vmatprep.subr.bf16.mxu0 0
  %1166 = vmatpush1.bf16.msra.mxu0 0
  %1167 = vmatprep.mubr.bf16.mxu0 0
  %1168 = vmatmul.mubr.bf16.gmra.mrb[0].mxu0 %v1081
  %v1169 = vpop.f32.mrb[0].mxu0
  %v1170 = vadd.f32 %v50, %v1169
  %v1171 = vpop.f32.mrb[0].mxu0
  %v1172 = vpop.f32.mrb[0].mxu0
  %v1173 = vpop.f32.mrb[0].mxu0
  %1174 = vdwg.mxu0
  %1175 = vmatprep.subr.bf16.mxu0 0
  %1176 = vmatpush1.bf16.msra.mxu0 %v471
  %1177 = vmatprep.subr.bf16.mxu0 0
  %1178 = vmatpush1.bf16.msra.mxu0 %v472
  %1179 = vmatprep.subr.bf16.mxu0 0
  %1180 = vmatpush1.bf16.msra.mxu0 %v473
  %1181 = vmatprep.subr.bf16.mxu0 0
  %1182 = vmatpush1.bf16.msra.mxu0 %v474
  %1183 = vmatprep.subr.bf16.mxu0 0
  %1184 = vmatpush1.bf16.msra.mxu0 %v475
  %1185 = vmatprep.subr.bf16.mxu0 0
  %1186 = vmatpush1.bf16.msra.mxu0 %v476
  %1187 = vmatprep.subr.bf16.mxu0 0
  %1188 = vmatpush1.bf16.msra.mxu0 %v477
  %1189 = vmatprep.subr.bf16.mxu0 0
  %1190 = vmatpush1.bf16.msra.mxu0 %v478
  %1191 = vmatprep.subr.bf16.mxu0 0
  %1192 = vmatpush1.bf16.msra.mxu0 0
  %1193 = vmatprep.subr.bf16.mxu0 0
  %1194 = vmatpush1.bf16.msra.mxu0 0
  %1195 = vmatprep.subr.bf16.mxu0 0
  %1196 = vmatpush1.bf16.msra.mxu0 0
  %1197 = vmatprep.subr.bf16.mxu0 0
  %1198 = vmatpush1.bf16.msra.mxu0 0
  %1199 = vmatprep.subr.bf16.mxu0 0
  %1200 = vmatpush1.bf16.msra.mxu0 0
  %1201 = vmatprep.subr.bf16.mxu0 0
  %1202 = vmatpush1.bf16.msra.mxu0 0
  %1203 = vmatprep.subr.bf16.mxu0 0
  %1204 = vmatpush1.bf16.msra.mxu0 0
  %1205 = vmatprep.subr.bf16.mxu0 0
  %1206 = vmatpush1.bf16.msra.mxu0 0
  %1207 = vmatprep.mubr.bf16.mxu0 0
  %1208 = vmatmul.mubr.bf16.gmra.mrb[0].mxu0 %v1013
  %v1209 = vpop.f32.mrb[0].mxu0
  %v1210 = vadd.f32 %v57, %v1209
  %v1211 = vpop.f32.mrb[0].mxu0
  %v1212 = vpop.f32.mrb[0].mxu0
  %v1213 = vpop.f32.mrb[0].mxu0
  %1214 = vdwg.mxu0
  %v1215 = vmul.f32 %v1132, %v1210
  %v1216 = vadd.f32 %v1170, %v1215
  %v1217 = vtanh.pop %v1216
  %v1218 = vsub.f32 %v1012, %v1217
  %v1219 = vmul.f32 %v1134, %v1218
  %v1220 = vadd.f32 %v1217, %v1219
  %v1221 = vpack.c.bf16 %v1220, %v1220
  %1222 = vmatprep.subr.bf16.mxu0 0
  %1223 = vmatpush1.bf16.msra.mxu0 %v582
  %1224 = vmatprep.subr.bf16.mxu0 0
  %1225 = vmatpush1.bf16.msra.mxu0 %v583
  %1226 = vmatprep.subr.bf16.mxu0 0
  %1227 = vmatpush1.bf16.msra.mxu0 %v584
  %1228 = vmatprep.subr.bf16.mxu0 0
  %1229 = vmatpush1.bf16.msra.mxu0 %v585
  %1230 = vmatprep.subr.bf16.mxu0 0
  %1231 = vmatpush1.bf16.msra.mxu0 %v586
  %1232 = vmatprep.subr.bf16.mxu0 0
  %1233 = vmatpush1.bf16.msra.mxu0 %v587
  %1234 = vmatprep.subr.bf16.mxu0 0
  %1235 = vmatpush1.bf16.msra.mxu0 %v588
  %1236 = vmatprep.subr.bf16.mxu0 0
  %1237 = vmatpush1.bf16.msra.mxu0 %v589
  %1238 = vmatprep.subr.bf16.mxu0 0
  %1239 = vmatpush1.bf16.msra.mxu0 0
  %1240 = vmatprep.subr.bf16.mxu0 0
  %1241 = vmatpush1.bf16.msra.mxu0 0
  %1242 = vmatprep.subr.bf16.mxu0 0
  %1243 = vmatpush1.bf16.msra.mxu0 0
  %1244 = vmatprep.subr.bf16.mxu0 0
  %1245 = vmatpush1.bf16.msra.mxu0 0
  %1246 = vmatprep.subr.bf16.mxu0 0
  %1247 = vmatpush1.bf16.msra.mxu0 0
  %1248 = vmatprep.subr.bf16.mxu0 0
  %1249 = vmatpush1.bf16.msra.mxu0 0
  %1250 = vmatprep.subr.bf16.mxu0 0
  %1251 = vmatpush1.bf16.msra.mxu0 0
  %1252 = vmatprep.subr.bf16.mxu0 0
  %1253 = vmatpush1.bf16.msra.mxu0 0
  %1254 = vmatprep.mubr.bf16.mxu0 0
  %1255 = vmatmul.mubr.bf16.gmra.mrb[0].mxu0 %v1221
  %v1256 = vpop.f32.mrb[0].mxu0
  %v1257 = vadd.f32 %v64, %v1256
  %v1258 = vpop.f32.mrb[0].mxu0
  %v1259 = vpop.f32.mrb[0].mxu0
  %v1260 = vpop.f32.mrb[0].mxu0
  %1261 = vdwg.mxu0
  %vm1263 = vcmp.ge.s32.totalorder %v1257, 0
  %v1264 = vxor.u32 %v1257, 2147483647
  %v1265 = vsel %vm1263, %v1257, %v1264
  %v1266 = vand.u32 %v1265, 4294967168
  %v1267 = vor.u32 %v1266, %v643
  %v1268 = vand.u32 %v1267, 65535
  %v1269 = vshra.s32 %v1267, 16
  %v1270 = vcvt.s32.f32 %v1268
  %v1271 = vcvt.s32.f32 %v1269
  %1272 = vmax.xlane.f32.xlu0 %v1271
  %v1273 = vpop.xlane.xlu0 %1272
  %vm1274 = vcmp.eq.f32.partialorder %v1271, %v1273
  %v1275 = vsel %vm1274, %v1270, -inf
  %1276 = vmax.xlane.f32.xlu0 %v1275
  %v1277 = vpop.xlane.xlu0 %1276
  %v1278 = vcvt.f32.s32 %v1277
  %v1279 = vcvt.f32.s32 %v1273
  %v1280 = vshll.u32 %v1279, 16
  %v1281 = vadd.s32 %v1280, %v1278
  %v1282 = vand.u32 %v1281, 127
  %v1283 = vsub.s32 127, %v1282
  %vm1284 = vcmp.eq.s32.totalorder %v67, 3
  %v1285 = vsel %vm1284, %v1283, %v1077
  %vm1286 = vcmp.eq.s32.totalorder %v67, %v1283
  %v1287 = vsel %vm1286, 1, 0
  %v1288 = vcvt.s32.f32 %v1287
  %v1289 = vpack.c.bf16 %v1288, %v1288
  %1290 = vmatprep.subr.bf16.mxu0 %v203
  %1291 = vmatpush1.bf16.msra.mxu0 %v202
  %1292 = vmatprep.subr.bf16.mxu0 %v205
  %1293 = vmatpush1.bf16.msra.mxu0 %v204
  %1294 = vmatprep.subr.bf16.mxu0 %v207
  %1295 = vmatpush1.bf16.msra.mxu0 %v206
  %1296 = vmatprep.subr.bf16.mxu0 %v209
  %1297 = vmatpush1.bf16.msra.mxu0 %v208
  %1298 = vmatprep.subr.bf16.mxu0 %v211
  %1299 = vmatpush1.bf16.msra.mxu0 %v210
  %1300 = vmatprep.subr.bf16.mxu0 %v213
  %1301 = vmatpush1.bf16.msra.mxu0 %v212
  %1302 = vmatprep.subr.bf16.mxu0 %v215
  %1303 = vmatpush1.bf16.msra.mxu0 %v214
  %1304 = vmatprep.subr.bf16.mxu0 %v217
  %1305 = vmatpush1.bf16.msra.mxu0 %v216
  %1306 = vmatprep.subr.bf16.mxu0 %v219
  %1307 = vmatpush1.bf16.msra.mxu0 %v218
  %1308 = vmatprep.subr.bf16.mxu0 %v221
  %1309 = vmatpush1.bf16.msra.mxu0 %v220
  %1310 = vmatprep.subr.bf16.mxu0 %v223
  %1311 = vmatpush1.bf16.msra.mxu0 %v222
  %1312 = vmatprep.subr.bf16.mxu0 %v225
  %1313 = vmatpush1.bf16.msra.mxu0 %v224
  %1314 = vmatprep.subr.bf16.mxu0 %v227
  %1315 = vmatpush1.bf16.msra.mxu0 %v226
  %1316 = vmatprep.subr.bf16.mxu0 %v229
  %1317 = vmatpush1.bf16.msra.mxu0 %v228
  %1318 = vmatprep.subr.bf16.mxu0 %v231
  %1319 = vmatpush1.bf16.msra.mxu0 %v230
  %1320 = vmatprep.subr.bf16.mxu0 %v233
  %1321 = vmatpush1.bf16.msra.mxu0 %v232
  %1322 = vmatprep.mubr.bf16.mxu0 %v1221
  %1323 = vmatmul.mubr.bf16.gmra.mrb[0].mxu0 %v1289
  %v1324 = vpop.f32.mrb[0].mxu0
  %v1325 = vadd.f32 %v38, %v1324
  %v1326 = vpop.f32.mrb[0].mxu0
  %v1327 = vadd.f32 %v42, %v1326
  %v1328 = vpop.f32.mrb[0].mxu0
  %v1329 = vpop.f32.mrb[0].mxu0
  %1330 = vdwg.mxu0
  %v1331 = vxor.u32 %v1325, 2147483648
  %v1332 = vxor.u32 %v1327, 2147483648
  %v1333 = vmul.f32 %v1331, 1.442695
  %v1334 = vpow.pop %v1333
  %v1335 = vmul.f32 %v1332, 1.442695
  %v1336 = vpow.pop %v1335
  %v1337 = vadd.f32 %v1334, 1.0
  %v1338 = vadd.f32 %v1336, 1.0
  %v1339 = vrcp.pop %v1337
  %v1340 = vmul.f32 1.0, %v1339
  %v1341 = vrcp.pop %v1338
  %v1342 = vmul.f32 1.0, %v1341
  %1343 = vmatprep.subr.bf16.mxu0 0
  %1344 = vmatpush1.bf16.msra.mxu0 %v383
  %1345 = vmatprep.subr.bf16.mxu0 0
  %1346 = vmatpush1.bf16.msra.mxu0 %v384
  %1347 = vmatprep.subr.bf16.mxu0 0
  %1348 = vmatpush1.bf16.msra.mxu0 %v385
  %1349 = vmatprep.subr.bf16.mxu0 0
  %1350 = vmatpush1.bf16.msra.mxu0 %v386
  %1351 = vmatprep.subr.bf16.mxu0 0
  %1352 = vmatpush1.bf16.msra.mxu0 %v387
  %1353 = vmatprep.subr.bf16.mxu0 0
  %1354 = vmatpush1.bf16.msra.mxu0 %v388
  %1355 = vmatprep.subr.bf16.mxu0 0
  %1356 = vmatpush1.bf16.msra.mxu0 %v389
  %1357 = vmatprep.subr.bf16.mxu0 0
  %1358 = vmatpush1.bf16.msra.mxu0 %v390
  %1359 = vmatprep.subr.bf16.mxu0 0
  %1360 = vmatpush1.bf16.msra.mxu0 0
  %1361 = vmatprep.subr.bf16.mxu0 0
  %1362 = vmatpush1.bf16.msra.mxu0 0
  %1363 = vmatprep.subr.bf16.mxu0 0
  %1364 = vmatpush1.bf16.msra.mxu0 0
  %1365 = vmatprep.subr.bf16.mxu0 0
  %1366 = vmatpush1.bf16.msra.mxu0 0
  %1367 = vmatprep.subr.bf16.mxu0 0
  %1368 = vmatpush1.bf16.msra.mxu0 0
  %1369 = vmatprep.subr.bf16.mxu0 0
  %1370 = vmatpush1.bf16.msra.mxu0 0
  %1371 = vmatprep.subr.bf16.mxu0 0
  %1372 = vmatpush1.bf16.msra.mxu0 0
  %1373 = vmatprep.subr.bf16.mxu0 0
  %1374 = vmatpush1.bf16.msra.mxu0 0
  %1375 = vmatprep.mubr.bf16.mxu0 0
  %1376 = vmatmul.mubr.bf16.gmra.mrb[0].mxu0 %v1289
  %v1377 = vpop.f32.mrb[0].mxu0
  %v1378 = vadd.f32 %v50, %v1377
  %v1379 = vpop.f32.mrb[0].mxu0
  %v1380 = vpop.f32.mrb[0].mxu0
  %v1381 = vpop.f32.mrb[0].mxu0
  %1382 = vdwg.mxu0
  %1383 = vmatprep.subr.bf16.mxu0 0
  %1384 = vmatpush1.bf16.msra.mxu0 %v471
  %1385 = vmatprep.subr.bf16.mxu0 0
  %1386 = vmatpush1.bf16.msra.mxu0 %v472
  %1387 = vmatprep.subr.bf16.mxu0 0
  %1388 = vmatpush1.bf16.msra.mxu0 %v473
  %1389 = vmatprep.subr.bf16.mxu0 0
  %1390 = vmatpush1.bf16.msra.mxu0 %v474
  %1391 = vmatprep.subr.bf16.mxu0 0
  %1392 = vmatpush1.bf16.msra.mxu0 %v475
  %1393 = vmatprep.subr.bf16.mxu0 0
  %1394 = vmatpush1.bf16.msra.mxu0 %v476
  %1395 = vmatprep.subr.bf16.mxu0 0
  %1396 = vmatpush1.bf16.msra.mxu0 %v477
  %1397 = vmatprep.subr.bf16.mxu0 0
  %1398 = vmatpush1.bf16.msra.mxu0 %v478
  %1399 = vmatprep.subr.bf16.mxu0 0
  %1400 = vmatpush1.bf16.msra.mxu0 0
  %1401 = vmatprep.subr.bf16.mxu0 0
  %1402 = vmatpush1.bf16.msra.mxu0 0
  %1403 = vmatprep.subr.bf16.mxu0 0
  %1404 = vmatpush1.bf16.msra.mxu0 0
  %1405 = vmatprep.subr.bf16.mxu0 0
  %1406 = vmatpush1.bf16.msra.mxu0 0
  %1407 = vmatprep.subr.bf16.mxu0 0
  %1408 = vmatpush1.bf16.msra.mxu0 0
  %1409 = vmatprep.subr.bf16.mxu0 0
  %1410 = vmatpush1.bf16.msra.mxu0 0
  %1411 = vmatprep.subr.bf16.mxu0 0
  %1412 = vmatpush1.bf16.msra.mxu0 0
  %1413 = vmatprep.subr.bf16.mxu0 0
  %1414 = vmatpush1.bf16.msra.mxu0 0
  %1415 = vmatprep.mubr.bf16.mxu0 0
  %1416 = vmatmul.mubr.bf16.gmra.mrb[0].mxu0 %v1221
  %v1417 = vpop.f32.mrb[0].mxu0
  %v1418 = vadd.f32 %v57, %v1417
  %v1419 = vpop.f32.mrb[0].mxu0
  %v1420 = vpop.f32.mrb[0].mxu0
  %v1421 = vpop.f32.mrb[0].mxu0
  %1422 = vdwg.mxu0
  %v1423 = vmul.f32 %v1340, %v1418
  %v1424 = vadd.f32 %v1378, %v1423
  %v1425 = vtanh.pop %v1424
  %v1426 = vsub.f32 %v1220, %v1425
  %v1427 = vmul.f32 %v1342, %v1426
  %v1428 = vadd.f32 %v1425, %v1427
  %v1429 = vpack.c.bf16 %v1428, %v1428
  %1430 = vmatprep.subr.bf16.mxu0 0
  %1431 = vmatpush1.bf16.msra.mxu0 %v582
  %1432 = vmatprep.subr.bf16.mxu0 0
  %1433 = vmatpush1.bf16.msra.mxu0 %v583
  %1434 = vmatprep.subr.bf16.mxu0 0
  %1435 = vmatpush1.bf16.msra.mxu0 %v584
  %1436 = vmatprep.subr.bf16.mxu0 0
  %1437 = vmatpush1.bf16.msra.mxu0 %v585
  %1438 = vmatprep.subr.bf16.mxu0 0
  %1439 = vmatpush1.bf16.msra.mxu0 %v586
  %1440 = vmatprep.subr.bf16.mxu0 0
  %1441 = vmatpush1.bf16.msra.mxu0 %v587
  %1442 = vmatprep.subr.bf16.mxu0 0
  %1443 = vmatpush1.bf16.msra.mxu0 %v588
  %1444 = vmatprep.subr.bf16.mxu0 0
  %1445 = vmatpush1.bf16.msra.mxu0 %v589
  %1446 = vmatprep.subr.bf16.mxu0 0
  %1447 = vmatpush1.bf16.msra.mxu0 0
  %1448 = vmatprep.subr.bf16.mxu0 0
  %1449 = vmatpush1.bf16.msra.mxu0 0
  %1450 = vmatprep.subr.bf16.mxu0 0
  %1451 = vmatpush1.bf16.msra.mxu0 0
  %1452 = vmatprep.subr.bf16.mxu0 0
  %1453 = vmatpush1.bf16.msra.mxu0 0
  %1454 = vmatprep.subr.bf16.mxu0 0
  %1455 = vmatpush1.bf16.msra.mxu0 0
  %1456 = vmatprep.subr.bf16.mxu0 0
  %1457 = vmatpush1.bf16.msra.mxu0 0
  %1458 = vmatprep.subr.bf16.mxu0 0
  %1459 = vmatpush1.bf16.msra.mxu0 0
  %1460 = vmatprep.subr.bf16.mxu0 0
  %1461 = vmatpush1.bf16.msra.mxu0 0
  %1462 = vmatprep.mubr.bf16.mxu0 0
  %1463 = vmatmul.mubr.bf16.gmra.mrb[0].mxu0 %v1429
  %v1464 = vpop.f32.mrb[0].mxu0
  %v1465 = vadd.f32 %v64, %v1464
  %v1466 = vpop.f32.mrb[0].mxu0
  %v1467 = vpop.f32.mrb[0].mxu0
  %v1468 = vpop.f32.mrb[0].mxu0
  %1469 = vdwg.mxu0
  %vm1471 = vcmp.ge.s32.totalorder %v1465, 0
  %v1472 = vxor.u32 %v1465, 2147483647
  %v1473 = vsel %vm1471, %v1465, %v1472
  %v1474 = vand.u32 %v1473, 4294967168
  %v1475 = vor.u32 %v1474, %v643
  %v1476 = vand.u32 %v1475, 65535
  %v1477 = vshra.s32 %v1475, 16
  %v1478 = vcvt.s32.f32 %v1476
  %v1479 = vcvt.s32.f32 %v1477
  %1480 = vmax.xlane.f32.xlu0 %v1479
  %v1481 = vpop.xlane.xlu0 %1480
  %vm1482 = vcmp.eq.f32.partialorder %v1479, %v1481
  %v1483 = vsel %vm1482, %v1478, -inf
  %1484 = vmax.xlane.f32.xlu0 %v1483
  %v1485 = vpop.xlane.xlu0 %1484
  %v1486 = vcvt.f32.s32 %v1485
  %v1487 = vcvt.f32.s32 %v1481
  %v1488 = vshll.u32 %v1487, 16
  %v1489 = vadd.s32 %v1488, %v1486
  %v1490 = vand.u32 %v1489, 127
  %v1491 = vsub.s32 127, %v1490
  %vm1492 = vcmp.eq.s32.totalorder %v67, 4
  %v1493 = vsel %vm1492, %v1491, %v1285
  %vm1494 = vcmp.eq.s32.totalorder %v67, %v1491
  %v1495 = vsel %vm1494, 1, 0
  %v1496 = vcvt.s32.f32 %v1495
  %v1497 = vpack.c.bf16 %v1496, %v1496
  %1498 = vmatprep.subr.bf16.mxu0 %v203
  %1499 = vmatpush1.bf16.msra.mxu0 %v202
  %1500 = vmatprep.subr.bf16.mxu0 %v205
  %1501 = vmatpush1.bf16.msra.mxu0 %v204
  %1502 = vmatprep.subr.bf16.mxu0 %v207
  %1503 = vmatpush1.bf16.msra.mxu0 %v206
  %1504 = vmatprep.subr.bf16.mxu0 %v209
  %1505 = vmatpush1.bf16.msra.mxu0 %v208
  %1506 = vmatprep.subr.bf16.mxu0 %v211
  %1507 = vmatpush1.bf16.msra.mxu0 %v210
  %1508 = vmatprep.subr.bf16.mxu0 %v213
  %1509 = vmatpush1.bf16.msra.mxu0 %v212
  %1510 = vmatprep.subr.bf16.mxu0 %v215
  %1511 = vmatpush1.bf16.msra.mxu0 %v214
  %1512 = vmatprep.subr.bf16.mxu0 %v217
  %1513 = vmatpush1.bf16.msra.mxu0 %v216
  %1514 = vmatprep.subr.bf16.mxu0 %v219
  %1515 = vmatpush1.bf16.msra.mxu0 %v218
  %1516 = vmatprep.subr.bf16.mxu0 %v221
  %1517 = vmatpush1.bf16.msra.mxu0 %v220
  %1518 = vmatprep.subr.bf16.mxu0 %v223
  %1519 = vmatpush1.bf16.msra.mxu0 %v222
  %1520 = vmatprep.subr.bf16.mxu0 %v225
  %1521 = vmatpush1.bf16.msra.mxu0 %v224
  %1522 = vmatprep.subr.bf16.mxu0 %v227
  %1523 = vmatpush1.bf16.msra.mxu0 %v226
  %1524 = vmatprep.subr.bf16.mxu0 %v229
  %1525 = vmatpush1.bf16.msra.mxu0 %v228
  %1526 = vmatprep.subr.bf16.mxu0 %v231
  %1527 = vmatpush1.bf16.msra.mxu0 %v230
  %1528 = vmatprep.subr.bf16.mxu0 %v233
  %1529 = vmatpush1.bf16.msra.mxu0 %v232
  %1530 = vmatprep.mubr.bf16.mxu0 %v1429
  %1531 = vmatmul.mubr.bf16.gmra.mrb[0].mxu0 %v1497
  %v1532 = vpop.f32.mrb[0].mxu0
  %v1533 = vadd.f32 %v38, %v1532
  %v1534 = vpop.f32.mrb[0].mxu0
  %v1535 = vadd.f32 %v42, %v1534
  %v1536 = vpop.f32.mrb[0].mxu0
  %v1537 = vpop.f32.mrb[0].mxu0
  %1538 = vdwg.mxu0
  %v1539 = vxor.u32 %v1533, 2147483648
  %v1540 = vxor.u32 %v1535, 2147483648
  %v1541 = vmul.f32 %v1539, 1.442695
  %v1542 = vpow.pop %v1541
  %v1543 = vmul.f32 %v1540, 1.442695
  %v1544 = vpow.pop %v1543
  %v1545 = vadd.f32 %v1542, 1.0
  %v1546 = vadd.f32 %v1544, 1.0
  %v1547 = vrcp.pop %v1545
  %v1548 = vmul.f32 1.0, %v1547
  %v1549 = vrcp.pop %v1546
  %v1550 = vmul.f32 1.0, %v1549
  %1551 = vmatprep.subr.bf16.mxu0 0
  %1552 = vmatpush1.bf16.msra.mxu0 %v383
  %1553 = vmatprep.subr.bf16.mxu0 0
  %1554 = vmatpush1.bf16.msra.mxu0 %v384
  %1555 = vmatprep.subr.bf16.mxu0 0
  %1556 = vmatpush1.bf16.msra.mxu0 %v385
  %1557 = vmatprep.subr.bf16.mxu0 0
  %1558 = vmatpush1.bf16.msra.mxu0 %v386
  %1559 = vmatprep.subr.bf16.mxu0 0
  %1560 = vmatpush1.bf16.msra.mxu0 %v387
  %1561 = vmatprep.subr.bf16.mxu0 0
  %1562 = vmatpush1.bf16.msra.mxu0 %v388
  %1563 = vmatprep.subr.bf16.mxu0 0
  %1564 = vmatpush1.bf16.msra.mxu0 %v389
  %1565 = vmatprep.subr.bf16.mxu0 0
  %1566 = vmatpush1.bf16.msra.mxu0 %v390
  %1567 = vmatprep.subr.bf16.mxu0 0
  %1568 = vmatpush1.bf16.msra.mxu0 0
  %1569 = vmatprep.subr.bf16.mxu0 0
  %1570 = vmatpush1.bf16.msra.mxu0 0
  %1571 = vmatprep.subr.bf16.mxu0 0
  %1572 = vmatpush1.bf16.msra.mxu0 0
  %1573 = vmatprep.subr.bf16.mxu0 0
  %1574 = vmatpush1.bf16.msra.mxu0 0
  %1575 = vmatprep.subr.bf16.mxu0 0
  %1576 = vmatpush1.bf16.msra.mxu0 0
  %1577 = vmatprep.subr.bf16.mxu0 0
  %1578 = vmatpush1.bf16.msra.mxu0 0
  %1579 = vmatprep.subr.bf16.mxu0 0
  %1580 = vmatpush1.bf16.msra.mxu0 0
  %1581 = vmatprep.subr.bf16.mxu0 0
  %1582 = vmatpush1.bf16.msra.mxu0 0
  %1583 = vmatprep.mubr.bf16.mxu0 0
  %1584 = vmatmul.mubr.bf16.gmra.mrb[0].mxu0 %v1497
  %v1585 = vpop.f32.mrb[0].mxu0
  %v1586 = vadd.f32 %v50, %v1585
  %v1587 = vpop.f32.mrb[0].mxu0
  %v1588 = vpop.f32.mrb[0].mxu0
  %v1589 = vpop.f32.mrb[0].mxu0
  %1590 = vdwg.mxu0
  %1591 = vmatprep.subr.bf16.mxu0 0
  %1592 = vmatpush1.bf16.msra.mxu0 %v471
  %1593 = vmatprep.subr.bf16.mxu0 0
  %1594 = vmatpush1.bf16.msra.mxu0 %v472
  %1595 = vmatprep.subr.bf16.mxu0 0
  %1596 = vmatpush1.bf16.msra.mxu0 %v473
  %1597 = vmatprep.subr.bf16.mxu0 0
  %1598 = vmatpush1.bf16.msra.mxu0 %v474
  %1599 = vmatprep.subr.bf16.mxu0 0
  %1600 = vmatpush1.bf16.msra.mxu0 %v475
  %1601 = vmatprep.subr.bf16.mxu0 0
  %1602 = vmatpush1.bf16.msra.mxu0 %v476
  %1603 = vmatprep.subr.bf16.mxu0 0
  %1604 = vmatpush1.bf16.msra.mxu0 %v477
  %1605 = vmatprep.subr.bf16.mxu0 0
  %1606 = vmatpush1.bf16.msra.mxu0 %v478
  %1607 = vmatprep.subr.bf16.mxu0 0
  %1608 = vmatpush1.bf16.msra.mxu0 0
  %1609 = vmatprep.subr.bf16.mxu0 0
  %1610 = vmatpush1.bf16.msra.mxu0 0
  %1611 = vmatprep.subr.bf16.mxu0 0
  %1612 = vmatpush1.bf16.msra.mxu0 0
  %1613 = vmatprep.subr.bf16.mxu0 0
  %1614 = vmatpush1.bf16.msra.mxu0 0
  %1615 = vmatprep.subr.bf16.mxu0 0
  %1616 = vmatpush1.bf16.msra.mxu0 0
  %1617 = vmatprep.subr.bf16.mxu0 0
  %1618 = vmatpush1.bf16.msra.mxu0 0
  %1619 = vmatprep.subr.bf16.mxu0 0
  %1620 = vmatpush1.bf16.msra.mxu0 0
  %1621 = vmatprep.subr.bf16.mxu0 0
  %1622 = vmatpush1.bf16.msra.mxu0 0
  %1623 = vmatprep.mubr.bf16.mxu0 0
  %1624 = vmatmul.mubr.bf16.gmra.mrb[0].mxu0 %v1429
  %v1625 = vpop.f32.mrb[0].mxu0
  %v1626 = vadd.f32 %v57, %v1625
  %v1627 = vpop.f32.mrb[0].mxu0
  %v1628 = vpop.f32.mrb[0].mxu0
  %v1629 = vpop.f32.mrb[0].mxu0
  %1630 = vdwg.mxu0
  %v1631 = vmul.f32 %v1548, %v1626
  %v1632 = vadd.f32 %v1586, %v1631
  %v1633 = vtanh.pop %v1632
  %v1634 = vsub.f32 %v1428, %v1633
  %v1635 = vmul.f32 %v1550, %v1634
  %v1636 = vadd.f32 %v1633, %v1635
  %v1637 = vpack.c.bf16 %v1636, %v1636
  %1638 = vmatprep.subr.bf16.mxu0 0
  %1639 = vmatpush1.bf16.msra.mxu0 %v582
  %1640 = vmatprep.subr.bf16.mxu0 0
  %1641 = vmatpush1.bf16.msra.mxu0 %v583
  %1642 = vmatprep.subr.bf16.mxu0 0
  %1643 = vmatpush1.bf16.msra.mxu0 %v584
  %1644 = vmatprep.subr.bf16.mxu0 0
  %1645 = vmatpush1.bf16.msra.mxu0 %v585
  %1646 = vmatprep.subr.bf16.mxu0 0
  %1647 = vmatpush1.bf16.msra.mxu0 %v586
  %1648 = vmatprep.subr.bf16.mxu0 0
  %1649 = vmatpush1.bf16.msra.mxu0 %v587
  %1650 = vmatprep.subr.bf16.mxu0 0
  %1651 = vmatpush1.bf16.msra.mxu0 %v588
  %1652 = vmatprep.subr.bf16.mxu0 0
  %1653 = vmatpush1.bf16.msra.mxu0 %v589
  %1654 = vmatprep.subr.bf16.mxu0 0
  %1655 = vmatpush1.bf16.msra.mxu0 0
  %1656 = vmatprep.subr.bf16.mxu0 0
  %1657 = vmatpush1.bf16.msra.mxu0 0
  %1658 = vmatprep.subr.bf16.mxu0 0
  %1659 = vmatpush1.bf16.msra.mxu0 0
  %1660 = vmatprep.subr.bf16.mxu0 0
  %1661 = vmatpush1.bf16.msra.mxu0 0
  %1662 = vmatprep.subr.bf16.mxu0 0
  %1663 = vmatpush1.bf16.msra.mxu0 0
  %1664 = vmatprep.subr.bf16.mxu0 0
  %1665 = vmatpush1.bf16.msra.mxu0 0
  %1666 = vmatprep.subr.bf16.mxu0 0
  %1667 = vmatpush1.bf16.msra.mxu0 0
  %1668 = vmatprep.subr.bf16.mxu0 0
  %1669 = vmatpush1.bf16.msra.mxu0 0
  %1670 = vmatprep.mubr.bf16.mxu0 0
  %1671 = vmatmul.mubr.bf16.gmra.mrb[0].mxu0 %v1637
  %v1672 = vpop.f32.mrb[0].mxu0
  %v1673 = vadd.f32 %v64, %v1672
  %v1674 = vpop.f32.mrb[0].mxu0
  %v1675 = vpop.f32.mrb[0].mxu0
  %v1676 = vpop.f32.mrb[0].mxu0
  %1677 = vdwg.mxu0
  %vm1679 = vcmp.ge.s32.totalorder %v1673, 0
  %v1680 = vxor.u32 %v1673, 2147483647
  %v1681 = vsel %vm1679, %v1673, %v1680
  %v1682 = vand.u32 %v1681, 4294967168
  %v1683 = vor.u32 %v1682, %v643
  %v1684 = vand.u32 %v1683, 65535
  %v1685 = vshra.s32 %v1683, 16
  %v1686 = vcvt.s32.f32 %v1684
  %v1687 = vcvt.s32.f32 %v1685
  %1688 = vmax.xlane.f32.xlu0 %v1687
  %v1689 = vpop.xlane.xlu0 %1688
  %vm1690 = vcmp.eq.f32.partialorder %v1687, %v1689
  %v1691 = vsel %vm1690, %v1686, -inf
  %1692 = vmax.xlane.f32.xlu0 %v1691
  %v1693 = vpop.xlane.xlu0 %1692
  %v1694 = vcvt.f32.s32 %v1693
  %v1695 = vcvt.f32.s32 %v1689
  %v1696 = vshll.u32 %v1695, 16
  %v1697 = vadd.s32 %v1696, %v1694
  %v1698 = vand.u32 %v1697, 127
  %v1699 = vsub.s32 127, %v1698
  %vm1700 = vcmp.eq.s32.totalorder %v67, 5
  %v1701 = vsel %vm1700, %v1699, %v1493
  %vm1702 = vcmp.eq.s32.totalorder %v67, %v1699
  %v1703 = vsel %vm1702, 1, 0
  %v1704 = vcvt.s32.f32 %v1703
  %v1705 = vpack.c.bf16 %v1704, %v1704
  %1706 = vmatprep.subr.bf16.mxu0 %v203
  %1707 = vmatpush1.bf16.msra.mxu0 %v202
  %1708 = vmatprep.subr.bf16.mxu0 %v205
  %1709 = vmatpush1.bf16.msra.mxu0 %v204
  %1710 = vmatprep.subr.bf16.mxu0 %v207
  %1711 = vmatpush1.bf16.msra.mxu0 %v206
  %1712 = vmatprep.subr.bf16.mxu0 %v209
  %1713 = vmatpush1.bf16.msra.mxu0 %v208
  %1714 = vmatprep.subr.bf16.mxu0 %v211
  %1715 = vmatpush1.bf16.msra.mxu0 %v210
  %1716 = vmatprep.subr.bf16.mxu0 %v213
  %1717 = vmatpush1.bf16.msra.mxu0 %v212
  %1718 = vmatprep.subr.bf16.mxu0 %v215
  %1719 = vmatpush1.bf16.msra.mxu0 %v214
  %1720 = vmatprep.subr.bf16.mxu0 %v217
  %1721 = vmatpush1.bf16.msra.mxu0 %v216
  %1722 = vmatprep.subr.bf16.mxu0 %v219
  %1723 = vmatpush1.bf16.msra.mxu0 %v218
  %1724 = vmatprep.subr.bf16.mxu0 %v221
  %1725 = vmatpush1.bf16.msra.mxu0 %v220
  %1726 = vmatprep.subr.bf16.mxu0 %v223
  %1727 = vmatpush1.bf16.msra.mxu0 %v222
  %1728 = vmatprep.subr.bf16.mxu0 %v225
  %1729 = vmatpush1.bf16.msra.mxu0 %v224
  %1730 = vmatprep.subr.bf16.mxu0 %v227
  %1731 = vmatpush1.bf16.msra.mxu0 %v226
  %1732 = vmatprep.subr.bf16.mxu0 %v229
  %1733 = vmatpush1.bf16.msra.mxu0 %v228
  %1734 = vmatprep.subr.bf16.mxu0 %v231
  %1735 = vmatpush1.bf16.msra.mxu0 %v230
  %1736 = vmatprep.subr.bf16.mxu0 %v233
  %1737 = vmatpush1.bf16.msra.mxu0 %v232
  %1738 = vmatprep.mubr.bf16.mxu0 %v1637
  %1739 = vmatmul.mubr.bf16.gmra.mrb[0].mxu0 %v1705
  %v1740 = vpop.f32.mrb[0].mxu0
  %v1741 = vadd.f32 %v38, %v1740
  %v1742 = vpop.f32.mrb[0].mxu0
  %v1743 = vadd.f32 %v42, %v1742
  %v1744 = vpop.f32.mrb[0].mxu0
  %v1745 = vpop.f32.mrb[0].mxu0
  %1746 = vdwg.mxu0
  %v1747 = vxor.u32 %v1741, 2147483648
  %v1748 = vxor.u32 %v1743, 2147483648
  %v1749 = vmul.f32 %v1747, 1.442695
  %v1750 = vpow.pop %v1749
  %v1751 = vmul.f32 %v1748, 1.442695
  %v1752 = vpow.pop %v1751
  %v1753 = vadd.f32 %v1750, 1.0
  %v1754 = vadd.f32 %v1752, 1.0
  %v1755 = vrcp.pop %v1753
  %v1756 = vmul.f32 1.0, %v1755
  %v1757 = vrcp.pop %v1754
  %v1758 = vmul.f32 1.0, %v1757
  %1759 = vmatprep.subr.bf16.mxu0 0
  %1760 = vmatpush1.bf16.msra.mxu0 %v383
  %1761 = vmatprep.subr.bf16.mxu0 0
  %1762 = vmatpush1.bf16.msra.mxu0 %v384
  %1763 = vmatprep.subr.bf16.mxu0 0
  %1764 = vmatpush1.bf16.msra.mxu0 %v385
  %1765 = vmatprep.subr.bf16.mxu0 0
  %1766 = vmatpush1.bf16.msra.mxu0 %v386
  %1767 = vmatprep.subr.bf16.mxu0 0
  %1768 = vmatpush1.bf16.msra.mxu0 %v387
  %1769 = vmatprep.subr.bf16.mxu0 0
  %1770 = vmatpush1.bf16.msra.mxu0 %v388
  %1771 = vmatprep.subr.bf16.mxu0 0
  %1772 = vmatpush1.bf16.msra.mxu0 %v389
  %1773 = vmatprep.subr.bf16.mxu0 0
  %1774 = vmatpush1.bf16.msra.mxu0 %v390
  %1775 = vmatprep.subr.bf16.mxu0 0
  %1776 = vmatpush1.bf16.msra.mxu0 0
  %1777 = vmatprep.subr.bf16.mxu0 0
  %1778 = vmatpush1.bf16.msra.mxu0 0
  %1779 = vmatprep.subr.bf16.mxu0 0
  %1780 = vmatpush1.bf16.msra.mxu0 0
  %1781 = vmatprep.subr.bf16.mxu0 0
  %1782 = vmatpush1.bf16.msra.mxu0 0
  %1783 = vmatprep.subr.bf16.mxu0 0
  %1784 = vmatpush1.bf16.msra.mxu0 0
  %1785 = vmatprep.subr.bf16.mxu0 0
  %1786 = vmatpush1.bf16.msra.mxu0 0
  %1787 = vmatprep.subr.bf16.mxu0 0
  %1788 = vmatpush1.bf16.msra.mxu0 0
  %1789 = vmatprep.subr.bf16.mxu0 0
  %1790 = vmatpush1.bf16.msra.mxu0 0
  %1791 = vmatprep.mubr.bf16.mxu0 0
  %1792 = vmatmul.mubr.bf16.gmra.mrb[0].mxu0 %v1705
  %v1793 = vpop.f32.mrb[0].mxu0
  %v1794 = vadd.f32 %v50, %v1793
  %v1795 = vpop.f32.mrb[0].mxu0
  %v1796 = vpop.f32.mrb[0].mxu0
  %v1797 = vpop.f32.mrb[0].mxu0
  %1798 = vdwg.mxu0
  %1799 = vmatprep.subr.bf16.mxu0 0
  %1800 = vmatpush1.bf16.msra.mxu0 %v471
  %1801 = vmatprep.subr.bf16.mxu0 0
  %1802 = vmatpush1.bf16.msra.mxu0 %v472
  %1803 = vmatprep.subr.bf16.mxu0 0
  %1804 = vmatpush1.bf16.msra.mxu0 %v473
  %1805 = vmatprep.subr.bf16.mxu0 0
  %1806 = vmatpush1.bf16.msra.mxu0 %v474
  %1807 = vmatprep.subr.bf16.mxu0 0
  %1808 = vmatpush1.bf16.msra.mxu0 %v475
  %1809 = vmatprep.subr.bf16.mxu0 0
  %1810 = vmatpush1.bf16.msra.mxu0 %v476
  %1811 = vmatprep.subr.bf16.mxu0 0
  %1812 = vmatpush1.bf16.msra.mxu0 %v477
  %1813 = vmatprep.subr.bf16.mxu0 0
  %1814 = vmatpush1.bf16.msra.mxu0 %v478
  %1815 = vmatprep.subr.bf16.mxu0 0
  %1816 = vmatpush1.bf16.msra.mxu0 0
  %1817 = vmatprep.subr.bf16.mxu0 0
  %1818 = vmatpush1.bf16.msra.mxu0 0
  %1819 = vmatprep.subr.bf16.mxu0 0
  %1820 = vmatpush1.bf16.msra.mxu0 0
  %1821 = vmatprep.subr.bf16.mxu0 0
  %1822 = vmatpush1.bf16.msra.mxu0 0
  %1823 = vmatprep.subr.bf16.mxu0 0
  %1824 = vmatpush1.bf16.msra.mxu0 0
  %1825 = vmatprep.subr.bf16.mxu0 0
  %1826 = vmatpush1.bf16.msra.mxu0 0
  %1827 = vmatprep.subr.bf16.mxu0 0
  %1828 = vmatpush1.bf16.msra.mxu0 0
  %1829 = vmatprep.subr.bf16.mxu0 0
  %1830 = vmatpush1.bf16.msra.mxu0 0
  %1831 = vmatprep.mubr.bf16.mxu0 0
  %1832 = vmatmul.mubr.bf16.gmra.mrb[0].mxu0 %v1637
  %v1833 = vpop.f32.mrb[0].mxu0
  %v1834 = vadd.f32 %v57, %v1833
  %v1835 = vpop.f32.mrb[0].mxu0
  %v1836 = vpop.f32.mrb[0].mxu0
  %v1837 = vpop.f32.mrb[0].mxu0
  %1838 = vdwg.mxu0
  %v1839 = vmul.f32 %v1756, %v1834
  %v1840 = vadd.f32 %v1794, %v1839
  %v1841 = vtanh.pop %v1840
  %v1842 = vsub.f32 %v1636, %v1841
  %v1843 = vmul.f32 %v1758, %v1842
  %v1844 = vadd.f32 %v1841, %v1843
  %v1845 = vpack.c.bf16 %v1844, %v1844
  %1846 = vmatprep.subr.bf16.mxu0 0
  %1847 = vmatpush1.bf16.msra.mxu0 %v582
  %1848 = vmatprep.subr.bf16.mxu0 0
  %1849 = vmatpush1.bf16.msra.mxu0 %v583
  %1850 = vmatprep.subr.bf16.mxu0 0
  %1851 = vmatpush1.bf16.msra.mxu0 %v584
  %1852 = vmatprep.subr.bf16.mxu0 0
  %1853 = vmatpush1.bf16.msra.mxu0 %v585
  %1854 = vmatprep.subr.bf16.mxu0 0
  %1855 = vmatpush1.bf16.msra.mxu0 %v586
  %1856 = vmatprep.subr.bf16.mxu0 0
  %1857 = vmatpush1.bf16.msra.mxu0 %v587
  %1858 = vmatprep.subr.bf16.mxu0 0
  %1859 = vmatpush1.bf16.msra.mxu0 %v588
  %1860 = vmatprep.subr.bf16.mxu0 0
  %1861 = vmatpush1.bf16.msra.mxu0 %v589
  %1862 = vmatprep.subr.bf16.mxu0 0
  %1863 = vmatpush1.bf16.msra.mxu0 0
  %1864 = vmatprep.subr.bf16.mxu0 0
  %1865 = vmatpush1.bf16.msra.mxu0 0
  %1866 = vmatprep.subr.bf16.mxu0 0
  %1867 = vmatpush1.bf16.msra.mxu0 0
  %1868 = vmatprep.subr.bf16.mxu0 0
  %1869 = vmatpush1.bf16.msra.mxu0 0
  %1870 = vmatprep.subr.bf16.mxu0 0
  %1871 = vmatpush1.bf16.msra.mxu0 0
  %1872 = vmatprep.subr.bf16.mxu0 0
  %1873 = vmatpush1.bf16.msra.mxu0 0
  %1874 = vmatprep.subr.bf16.mxu0 0
  %1875 = vmatpush1.bf16.msra.mxu0 0
  %1876 = vmatprep.subr.bf16.mxu0 0
  %1877 = vmatpush1.bf16.msra.mxu0 0
  %1878 = vmatprep.mubr.bf16.mxu0 0
  %1879 = vmatmul.mubr.bf16.gmra.mrb[0].mxu0 %v1845
  %v1880 = vpop.f32.mrb[0].mxu0
  %v1881 = vadd.f32 %v64, %v1880
  %v1882 = vpop.f32.mrb[0].mxu0
  %v1883 = vpop.f32.mrb[0].mxu0
  %v1884 = vpop.f32.mrb[0].mxu0
  %1885 = vdwg.mxu0
  %vm1887 = vcmp.ge.s32.totalorder %v1881, 0
  %v1888 = vxor.u32 %v1881, 2147483647
  %v1889 = vsel %vm1887, %v1881, %v1888
  %v1890 = vand.u32 %v1889, 4294967168
  %v1891 = vor.u32 %v1890, %v643
  %v1892 = vand.u32 %v1891, 65535
  %v1893 = vshra.s32 %v1891, 16
  %v1894 = vcvt.s32.f32 %v1892
  %v1895 = vcvt.s32.f32 %v1893
  %1896 = vmax.xlane.f32.xlu0 %v1895
  %v1897 = vpop.xlane.xlu0 %1896
  %vm1898 = vcmp.eq.f32.partialorder %v1895, %v1897
  %v1899 = vsel %vm1898, %v1894, -inf
  %1900 = vmax.xlane.f32.xlu0 %v1899
  %v1901 = vpop.xlane.xlu0 %1900
  %v1902 = vcvt.f32.s32 %v1901
  %v1903 = vcvt.f32.s32 %v1897
  %v1904 = vshll.u32 %v1903, 16
  %v1905 = vadd.s32 %v1904, %v1902
  %v1906 = vand.u32 %v1905, 127
  %v1907 = vsub.s32 127, %v1906
  %vm1908 = vcmp.eq.s32.totalorder %v67, 6
  %v1909 = vsel %vm1908, %v1907, %v1701
  %vm1910 = vcmp.eq.s32.totalorder %v67, %v1907
  %v1911 = vsel %vm1910, 1, 0
  %v1912 = vcvt.s32.f32 %v1911
  %v1913 = vpack.c.bf16 %v1912, %v1912
  %1914 = vmatprep.subr.bf16.mxu0 %v203
  %1915 = vmatpush1.bf16.msra.mxu0 %v202
  %1916 = vmatprep.subr.bf16.mxu0 %v205
  %1917 = vmatpush1.bf16.msra.mxu0 %v204
  %1918 = vmatprep.subr.bf16.mxu0 %v207
  %1919 = vmatpush1.bf16.msra.mxu0 %v206
  %1920 = vmatprep.subr.bf16.mxu0 %v209
  %1921 = vmatpush1.bf16.msra.mxu0 %v208
  %1922 = vmatprep.subr.bf16.mxu0 %v211
  %1923 = vmatpush1.bf16.msra.mxu0 %v210
  %1924 = vmatprep.subr.bf16.mxu0 %v213
  %1925 = vmatpush1.bf16.msra.mxu0 %v212
  %1926 = vmatprep.subr.bf16.mxu0 %v215
  %1927 = vmatpush1.bf16.msra.mxu0 %v214
  %1928 = vmatprep.subr.bf16.mxu0 %v217
  %1929 = vmatpush1.bf16.msra.mxu0 %v216
  %1930 = vmatprep.subr.bf16.mxu0 %v219
  %1931 = vmatpush1.bf16.msra.mxu0 %v218
  %1932 = vmatprep.subr.bf16.mxu0 %v221
  %1933 = vmatpush1.bf16.msra.mxu0 %v220
  %1934 = vmatprep.subr.bf16.mxu0 %v223
  %1935 = vmatpush1.bf16.msra.mxu0 %v222
  %1936 = vmatprep.subr.bf16.mxu0 %v225
  %1937 = vmatpush1.bf16.msra.mxu0 %v224
  %1938 = vmatprep.subr.bf16.mxu0 %v227
  %1939 = vmatpush1.bf16.msra.mxu0 %v226
  %1940 = vmatprep.subr.bf16.mxu0 %v229
  %1941 = vmatpush1.bf16.msra.mxu0 %v228
  %1942 = vmatprep.subr.bf16.mxu0 %v231
  %1943 = vmatpush1.bf16.msra.mxu0 %v230
  %1944 = vmatprep.subr.bf16.mxu0 %v233
  %1945 = vmatpush1.bf16.msra.mxu0 %v232
  %1946 = vmatprep.mubr.bf16.mxu0 %v1845
  %1947 = vmatmul.mubr.bf16.gmra.mrb[0].mxu0 %v1913
  %v1948 = vpop.f32.mrb[0].mxu0
  %v1949 = vadd.f32 %v38, %v1948
  %v1950 = vpop.f32.mrb[0].mxu0
  %v1951 = vadd.f32 %v42, %v1950
  %v1952 = vpop.f32.mrb[0].mxu0
  %v1953 = vpop.f32.mrb[0].mxu0
  %1954 = vdwg.mxu0
  %v1955 = vxor.u32 %v1949, 2147483648
  %v1956 = vxor.u32 %v1951, 2147483648
  %v1957 = vmul.f32 %v1955, 1.442695
  %v1958 = vpow.pop %v1957
  %v1959 = vmul.f32 %v1956, 1.442695
  %v1960 = vpow.pop %v1959
  %v1961 = vadd.f32 %v1958, 1.0
  %v1962 = vadd.f32 %v1960, 1.0
  %v1963 = vrcp.pop %v1961
  %v1964 = vmul.f32 1.0, %v1963
  %v1965 = vrcp.pop %v1962
  %v1966 = vmul.f32 1.0, %v1965
  %1967 = vmatprep.subr.bf16.mxu0 0
  %1968 = vmatpush1.bf16.msra.mxu0 %v383
  %1969 = vmatprep.subr.bf16.mxu0 0
  %1970 = vmatpush1.bf16.msra.mxu0 %v384
  %1971 = vmatprep.subr.bf16.mxu0 0
  %1972 = vmatpush1.bf16.msra.mxu0 %v385
  %1973 = vmatprep.subr.bf16.mxu0 0
  %1974 = vmatpush1.bf16.msra.mxu0 %v386
  %1975 = vmatprep.subr.bf16.mxu0 0
  %1976 = vmatpush1.bf16.msra.mxu0 %v387
  %1977 = vmatprep.subr.bf16.mxu0 0
  %1978 = vmatpush1.bf16.msra.mxu0 %v388
  %1979 = vmatprep.subr.bf16.mxu0 0
  %1980 = vmatpush1.bf16.msra.mxu0 %v389
  %1981 = vmatprep.subr.bf16.mxu0 0
  %1982 = vmatpush1.bf16.msra.mxu0 %v390
  %1983 = vmatprep.subr.bf16.mxu0 0
  %1984 = vmatpush1.bf16.msra.mxu0 0
  %1985 = vmatprep.subr.bf16.mxu0 0
  %1986 = vmatpush1.bf16.msra.mxu0 0
  %1987 = vmatprep.subr.bf16.mxu0 0
  %1988 = vmatpush1.bf16.msra.mxu0 0
  %1989 = vmatprep.subr.bf16.mxu0 0
  %1990 = vmatpush1.bf16.msra.mxu0 0
  %1991 = vmatprep.subr.bf16.mxu0 0
  %1992 = vmatpush1.bf16.msra.mxu0 0
  %1993 = vmatprep.subr.bf16.mxu0 0
  %1994 = vmatpush1.bf16.msra.mxu0 0
  %1995 = vmatprep.subr.bf16.mxu0 0
  %1996 = vmatpush1.bf16.msra.mxu0 0
  %1997 = vmatprep.subr.bf16.mxu0 0
  %1998 = vmatpush1.bf16.msra.mxu0 0
  %1999 = vmatprep.mubr.bf16.mxu0 0
  %2000 = vmatmul.mubr.bf16.gmra.mrb[0].mxu0 %v1913
  %v2001 = vpop.f32.mrb[0].mxu0
  %v2002 = vadd.f32 %v50, %v2001
  %v2003 = vpop.f32.mrb[0].mxu0
  %v2004 = vpop.f32.mrb[0].mxu0
  %v2005 = vpop.f32.mrb[0].mxu0
  %2006 = vdwg.mxu0
  %2007 = vmatprep.subr.bf16.mxu0 0
  %2008 = vmatpush1.bf16.msra.mxu0 %v471
  %2009 = vmatprep.subr.bf16.mxu0 0
  %2010 = vmatpush1.bf16.msra.mxu0 %v472
  %2011 = vmatprep.subr.bf16.mxu0 0
  %2012 = vmatpush1.bf16.msra.mxu0 %v473
  %2013 = vmatprep.subr.bf16.mxu0 0
  %2014 = vmatpush1.bf16.msra.mxu0 %v474
  %2015 = vmatprep.subr.bf16.mxu0 0
  %2016 = vmatpush1.bf16.msra.mxu0 %v475
  %2017 = vmatprep.subr.bf16.mxu0 0
  %2018 = vmatpush1.bf16.msra.mxu0 %v476
  %2019 = vmatprep.subr.bf16.mxu0 0
  %2020 = vmatpush1.bf16.msra.mxu0 %v477
  %2021 = vmatprep.subr.bf16.mxu0 0
  %2022 = vmatpush1.bf16.msra.mxu0 %v478
  %2023 = vmatprep.subr.bf16.mxu0 0
  %2024 = vmatpush1.bf16.msra.mxu0 0
  %2025 = vmatprep.subr.bf16.mxu0 0
  %2026 = vmatpush1.bf16.msra.mxu0 0
  %2027 = vmatprep.subr.bf16.mxu0 0
  %2028 = vmatpush1.bf16.msra.mxu0 0
  %2029 = vmatprep.subr.bf16.mxu0 0
  %2030 = vmatpush1.bf16.msra.mxu0 0
  %2031 = vmatprep.subr.bf16.mxu0 0
  %2032 = vmatpush1.bf16.msra.mxu0 0
  %2033 = vmatprep.subr.bf16.mxu0 0
  %2034 = vmatpush1.bf16.msra.mxu0 0
  %2035 = vmatprep.subr.bf16.mxu0 0
  %2036 = vmatpush1.bf16.msra.mxu0 0
  %2037 = vmatprep.subr.bf16.mxu0 0
  %2038 = vmatpush1.bf16.msra.mxu0 0
  %2039 = vmatprep.mubr.bf16.mxu0 0
  %2040 = vmatmul.mubr.bf16.gmra.mrb[0].mxu0 %v1845
  %v2041 = vpop.f32.mrb[0].mxu0
  %v2042 = vadd.f32 %v57, %v2041
  %v2043 = vpop.f32.mrb[0].mxu0
  %v2044 = vpop.f32.mrb[0].mxu0
  %v2045 = vpop.f32.mrb[0].mxu0
  %2046 = vdwg.mxu0
  %v2047 = vmul.f32 %v1964, %v2042
  %v2048 = vadd.f32 %v2002, %v2047
  %v2049 = vtanh.pop %v2048
  %v2050 = vsub.f32 %v1844, %v2049
  %v2051 = vmul.f32 %v1966, %v2050
  %v2052 = vadd.f32 %v2049, %v2051
  %v2053 = vpack.c.bf16 %v2052, %v2052
  %2054 = vmatprep.subr.bf16.mxu0 0
  %2055 = vmatpush1.bf16.msra.mxu0 %v582
  %2056 = vmatprep.subr.bf16.mxu0 0
  %2057 = vmatpush1.bf16.msra.mxu0 %v583
  %2058 = vmatprep.subr.bf16.mxu0 0
  %2059 = vmatpush1.bf16.msra.mxu0 %v584
  %2060 = vmatprep.subr.bf16.mxu0 0
  %2061 = vmatpush1.bf16.msra.mxu0 %v585
  %2062 = vmatprep.subr.bf16.mxu0 0
  %2063 = vmatpush1.bf16.msra.mxu0 %v586
  %2064 = vmatprep.subr.bf16.mxu0 0
  %2065 = vmatpush1.bf16.msra.mxu0 %v587
  %2066 = vmatprep.subr.bf16.mxu0 0
  %2067 = vmatpush1.bf16.msra.mxu0 %v588
  %2068 = vmatprep.subr.bf16.mxu0 0
  %2069 = vmatpush1.bf16.msra.mxu0 %v589
  %2070 = vmatprep.subr.bf16.mxu0 0
  %2071 = vmatpush1.bf16.msra.mxu0 0
  %2072 = vmatprep.subr.bf16.mxu0 0
  %2073 = vmatpush1.bf16.msra.mxu0 0
  %2074 = vmatprep.subr.bf16.mxu0 0
  %2075 = vmatpush1.bf16.msra.mxu0 0
  %2076 = vmatprep.subr.bf16.mxu0 0
  %2077 = vmatpush1.bf16.msra.mxu0 0
  %2078 = vmatprep.subr.bf16.mxu0 0
  %2079 = vmatpush1.bf16.msra.mxu0 0
  %2080 = vmatprep.subr.bf16.mxu0 0
  %2081 = vmatpush1.bf16.msra.mxu0 0
  %2082 = vmatprep.subr.bf16.mxu0 0
  %2083 = vmatpush1.bf16.msra.mxu0 0
  %2084 = vmatprep.subr.bf16.mxu0 0
  %2085 = vmatpush1.bf16.msra.mxu0 0
  %2086 = vmatprep.mubr.bf16.mxu0 0
  %2087 = vmatmul.mubr.bf16.gmra.mrb[0].mxu0 %v2053
  %v2088 = vpop.f32.mrb[0].mxu0
  %v2089 = vadd.f32 %v64, %v2088
  %v2090 = vpop.f32.mrb[0].mxu0
  %v2091 = vpop.f32.mrb[0].mxu0
  %v2092 = vpop.f32.mrb[0].mxu0
  %2093 = vdwg.mxu0
  %vm2095 = vcmp.ge.s32.totalorder %v2089, 0
  %v2096 = vxor.u32 %v2089, 2147483647
  %v2097 = vsel %vm2095, %v2089, %v2096
  %v2098 = vand.u32 %v2097, 4294967168
  %v2099 = vor.u32 %v2098, %v643
  %v2100 = vand.u32 %v2099, 65535
  %v2101 = vshra.s32 %v2099, 16
  %v2102 = vcvt.s32.f32 %v2100
  %v2103 = vcvt.s32.f32 %v2101
  %2104 = vmax.xlane.f32.xlu0 %v2103
  %v2105 = vpop.xlane.xlu0 %2104
  %vm2106 = vcmp.eq.f32.partialorder %v2103, %v2105
  %v2107 = vsel %vm2106, %v2102, -inf
  %2108 = vmax.xlane.f32.xlu0 %v2107
  %v2109 = vpop.xlane.xlu0 %2108
  %v2110 = vcvt.f32.s32 %v2109
  %v2111 = vcvt.f32.s32 %v2105
  %v2112 = vshll.u32 %v2111, 16
  %v2113 = vadd.s32 %v2112, %v2110
  %v2114 = vand.u32 %v2113, 127
  %v2115 = vsub.s32 127, %v2114
  %vm2116 = vcmp.eq.s32.totalorder %v67, 7
  %v2117 = vsel %vm2116, %v2115, %v1909
  %2118 = vst [vmem:[%s9] sm:$0xff] %v2117
  // Predicated region
  $region38: #{sampling_decode.1} parent=0 // pred_check
    _
  $region39: #{sampling_decode.1} parent=0 // pred_check_branch
    %2120 = sbr.rel (0) target = $region41
  $region40: #{sampling_decode.1} parent=0 // pred_region
    _
  $region41: #{sampling_decode.1} parent=0 // pred_fallthru
    _
  // Predicated region
  $region42: #{sampling_decode.1} parent=0 // pred_check
    _
  $region43: #{sampling_decode.1} parent=0 // pred_check_branch
    %2122 = sbr.rel (0) target = $region45
  $region44: #{sampling_decode.1} parent=0 // pred_region
    _
  $region45: #{sampling_decode.1} parent=0 // pred_fallthru
    _

</llo_original>
